<compile_context>
chip_gen: v5e
topology: v5e:2x2
jax: 0.10.0
libtpu: 0.0.40
codegen_flags: <defaults>
</compile_context>

<pallas_src>
import functools

import jax
import jax.numpy as jnp
from jax import lax
from jax.experimental import pallas as pl
from jax.experimental.pallas import tpu as pltpu


_VMEM_LIMIT = 48 * 1024 * 1024          # explicit scoped-VMEM ceiling (< v7x 64 MiB)
_VMEM_TILE_BUDGET = 24 * 1024 * 1024    # what the tile picker may consume


def _pick_k_tile(k, target=512):
    """Contraction tile: multiple of 128 dividing k, ~target deep, else full K."""
    if k <= target or k % 128 != 0:
        return k
    for t in range(target, 127, -128):
        if k % t == 0:
            return t
    return k


def _pick_lane_tile(m, per_lane_bytes, cap=512):
    """Largest lane-dim (minor) tile: multiple of 128 dividing m, within VMEM budget."""
    if m <= 128 or m % 128 != 0:
        return m
    best = 128
    for t in range(256, min(m, cap) + 1, 128):
        if m % t == 0 and t * per_lane_bytes <= _VMEM_TILE_BUDGET:
            best = t
    return best


# ----------------------------- Pallas kernels ------------------------------

def _matmul_kernel(l_ref, r_ref, o_ref, acc_ref):
    # (No, tk) @ (tk, tm), accumulated over the K grid axis in an f32 VMEM scratch.
    @pl.when(pl.program_id(1) == 0)
    def _init():
        acc_ref[...] = jnp.zeros_like(acc_ref)

    acc_ref[...] += jnp.dot(l_ref[...], r_ref[...],
                            preferred_element_type=jnp.float32)

    @pl.when(pl.program_id(1) == pl.num_programs(1) - 1)
    def _done():
        o_ref[...] = acc_ref[...].astype(o_ref.dtype)


def _matmul_bias_kernel(l_ref, r_ref, b_ref, o_ref, acc_ref):
    @pl.when(pl.program_id(1) == 0)
    def _init():
        acc_ref[...] = jnp.zeros_like(acc_ref)

    acc_ref[...] += jnp.dot(l_ref[...], r_ref[...],
                            preferred_element_type=jnp.float32)

    @pl.when(pl.program_id(1) == pl.num_programs(1) - 1)
    def _done():
        o_ref[...] = (acc_ref[...] + b_ref[...]).astype(o_ref.dtype)


def _bn_stats_kernel(x_ref, g_ref, b_ref, scale_ref, shift_ref,
                     sum_ref, sq_ref, *, total_m, eps):
    # Pass 1: per-channel sum / sum-of-squares reduced over the M grid axis.
    @pl.when(pl.program_id(0) == 0)
    def _init():
        sum_ref[...] = jnp.zeros_like(sum_ref)
        sq_ref[...] = jnp.zeros_like(sq_ref)

    x = x_ref[...].astype(jnp.float32)
    sum_ref[...] += jnp.sum(x, axis=1, keepdims=True)
    sq_ref[...] += jnp.sum(x * x, axis=1, keepdims=True)

    @pl.when(pl.program_id(0) == pl.num_programs(0) - 1)
    def _done():
        inv_m = jnp.float32(1.0 / total_m)
        mean = sum_ref[...] * inv_m
        var = jnp.maximum(sq_ref[...] * inv_m - mean * mean, 0.0)   # biased var
        scale = g_ref[...] * lax.rsqrt(var + eps)
        scale_ref[...] = scale
        shift_ref[...] = b_ref[...] - mean * scale


def _bn_apply_relu_kernel(x_ref, scale_ref, shift_ref, o_ref):
    # Pass 2: single FMA per element + ReLU (scale/shift precomputed per channel).
    y = x_ref[...] * scale_ref[...] + shift_ref[...]
    o_ref[...] = jnp.maximum(y, 0.0).astype(o_ref.dtype)


# ------------------------------ kernel wrappers ------------------------------

def matmul_cm(lhs, rhs, bias=None, out_dtype=jnp.float32):
    """out[No, M] = lhs[No, K] @ rhs[K, M] (+ bias[No, 1]), channel-major.

    M (= N*H*W) sits on the lane axis -> lane-dense loads/stores.  Tiled over
    (M, K); K accumulated in f32 VMEM scratch; bf16 operands feed the MXU.
    """
    lhs = lhs.astype(jnp.bfloat16)
    rhs = rhs.astype(jnp.bfloat16)
    no, k = lhs.shape
    k2, m = rhs.shape
    assert k == k2
    out_bytes = jnp.dtype(out_dtype).itemsize

    tk = _pick_k_tile(k)
    per_lane = 2 * tk * 2 + 2 * no * out_bytes + no * 4   # rhs(x2 buf) + out(x2) + acc
    tm = _pick_lane_tile(m, per_lane, cap=512)
    grid = (m // tm, k // tk)

    in_specs = [
        pl.BlockSpec((no, tk), lambda mi, ki: (0, ki)),
        pl.BlockSpec((tk, tm), lambda mi, ki: (ki, mi)),
    ]
    args = [lhs, rhs]
    if bias is not None:
        in_specs.append(pl.BlockSpec((no, 1), lambda mi, ki: (0, 0)))
        args.append(bias.reshape(no, 1).astype(jnp.float32))
        kernel = _matmul_bias_kernel
    else:
        kernel = _matmul_kernel

    return pl.pallas_call(
        kernel,
        out_shape=jax.ShapeDtypeStruct((no, m), out_dtype),
        grid=grid,
        in_specs=in_specs,
        out_specs=pl.BlockSpec((no, tm), lambda mi, ki: (0, mi)),
        scratch_shapes=[pltpu.VMEM((no, tm), jnp.float32)],
        compiler_params=pltpu.CompilerParams(
            dimension_semantics=("parallel", "arbitrary"),
            vmem_limit_bytes=_VMEM_LIMIT,
        ),
    )(*args)


def bn_relu_cm(x_cm2d, gamma, beta, out_dtype=jnp.float32, eps=1e-5):
    """Training-mode BatchNorm + ReLU on a channel-major (C, M) slab (two passes)."""
    c, m = x_cm2d.shape
    g2 = gamma.reshape(c, 1).astype(jnp.float32)
    b2 = beta.reshape(c, 1).astype(jnp.float32)

    tm_s = _pick_lane_tile(m, 2 * c * 4, cap=512)
    scale, shift = pl.pallas_call(
        functools.partial(_bn_stats_kernel, total_m=float(m), eps=eps),
        out_shape=(jax.ShapeDtypeStruct((c, 1), jnp.float32),
                   jax.ShapeDtypeStruct((c, 1), jnp.float32)),
        grid=(m // tm_s,),
        in_specs=[
            pl.BlockSpec((c, tm_s), lambda mi: (0, mi)),
            pl.BlockSpec((c, 1), lambda mi: (0, 0)),
            pl.BlockSpec((c, 1), lambda mi: (0, 0)),
        ],
        out_specs=(pl.BlockSpec((c, 1), lambda mi: (0, 0)),
                   pl.BlockSpec((c, 1), lambda mi: (0, 0))),
        scratch_shapes=[pltpu.VMEM((c, 1), jnp.float32),
                        pltpu.VMEM((c, 1), jnp.float32)],
        compiler_params=pltpu.CompilerParams(
            dimension_semantics=("arbitrary",),
            vmem_limit_bytes=_VMEM_LIMIT,
        ),
    )(x_cm2d, g2, b2)

    out_bytes = jnp.dtype(out_dtype).itemsize
    tm_a = _pick_lane_tile(m, 2 * c * 4 + 2 * c * out_bytes, cap=512)
    return pl.pallas_call(
        _bn_apply_relu_kernel,
        out_shape=jax.ShapeDtypeStruct((c, m), out_dtype),
        grid=(m // tm_a,),
        in_specs=[
            pl.BlockSpec((c, tm_a), lambda mi: (0, mi)),
            pl.BlockSpec((c, 1), lambda mi: (0, 0)),
            pl.BlockSpec((c, 1), lambda mi: (0, 0)),
        ],
        out_specs=pl.BlockSpec((c, tm_a), lambda mi: (0, mi)),
        compiler_params=pltpu.CompilerParams(
            dimension_semantics=("parallel",),
            vmem_limit_bytes=_VMEM_LIMIT,
        ),
    )(x_cm2d, scale, shift)


# ------------------------------ layer wrappers ------------------------------

def conv_transpose_2x2_s2_cm(x_cm, w, b):
    """ConvTranspose2d(Cin, Cout, kernel_size=2, stride=2), channel-major.
    x_cm: (Cin, N, H, W) -> (Cout, N, 2H, 2W). w: (Cin, Cout, 2, 2), b: (Cout,)."""
    cin, n, h, wd = x_cm.shape
    cout = w.shape[1]
    # rows ordered (kh, kw, co): out[co,n,2h+kh,2w+kw] = sum_ci x[ci,n,h,w] w[ci,co,kh,kw] + b[co]
    lhs = jnp.transpose(w, (2, 3, 1, 0)).reshape(4 * cout, cin)
    bias = jnp.tile(b, 4)
    y = matmul_cm(lhs, x_cm.reshape(cin, n * h * wd), bias=bias,
                  out_dtype=jnp.bfloat16)
    y = y.reshape(2, 2, cout, n, h, wd)
    # TODO(synk): the (kh,kw) interleave scatter could be folded into the matmul's
    # output index_map to save this XLA transpose pass.
    return jnp.transpose(y, (2, 3, 4, 0, 5, 1)).reshape(cout, n, 2 * h, 2 * wd)


def conv3x3_bn_relu_cm(x_cm, w, gamma, beta, out_dtype):
    """Conv2d(k=3, pad=1) + BatchNorm2d(train) + ReLU, channel-major.
    Conv bias is dropped: a per-channel bias followed by train-mode BN cancels exactly."""
    cin, n, h, wd = x_cm.shape
    cout = w.shape[0]
    xp = jnp.pad(x_cm, ((0, 0), (0, 0), (1, 1), (1, 1)))
    # TODO(synk): the 9x im2col materialization could be eliminated with tap-offset
    # input blocks on the K grid axis; kept as XLA glue here for robustness.
    patches = jnp.stack(
        [xp[:, :, kh:kh + h, kw:kw + wd] for kh in range(3) for kw in range(3)],
        axis=0,
    )                                                   # (9, Cin, N, H, W), rows (tap, ci)
    rhs = patches.reshape(9 * cin, n * h * wd)
    lhs = jnp.transpose(w, (0, 2, 3, 1)).reshape(cout, 9 * cin)   # cols (kh, kw, ci)
    y = matmul_cm(lhs, rhs, bias=None, out_dtype=jnp.float32)
    y = bn_relu_cm(y, gamma, beta, out_dtype=out_dtype)
    return y.reshape(cout, n, h, wd)


def up_forward(params, x1_nchw, x2_nchw):
    """Forward pass of the PyTorch `Up` module. Inputs/outputs are NCHW float32."""
    # channel-major (C, N, H, W); activations in bf16 (MXU operands), BN math in f32.
    x1 = jnp.transpose(x1_nchw, (1, 0, 2, 3)).astype(jnp.bfloat16)
    x2 = jnp.transpose(x2_nchw, (1, 0, 2, 3)).astype(jnp.bfloat16)

    # Upsample (ConvTranspose2d k=2 s=2)
    y = conv_transpose_2x2_s2_cm(x1, params["up_w"], params["up_b"])

    # Pad to x2 spatial size (F.pad semantics)
    d_y = x2.shape[2] - y.shape[2]
    d_x = x2.shape[3] - y.shape[3]
    y = jnp.pad(y, ((0, 0), (0, 0),
                    (d_y // 2, d_y - d_y // 2), (d_x // 2, d_x - d_x // 2)))

    # torch.cat([x2, x1], dim=1) -> channel axis is axis 0 in channel-major layout
    x = jnp.concatenate([x2, y], axis=0)

    # DoubleConv (intermediate activation kept in bf16, final output in f32)
    x = conv3x3_bn_relu_cm(x, params["c1_w"], params["bn1_g"], params["bn1_b"],
                           out_dtype=jnp.bfloat16)
    x = conv3x3_bn_relu_cm(x, params["c2_w"], params["bn2_g"], params["bn2_b"],
                           out_dtype=jnp.float32)

    return jnp.transpose(x, (1, 0, 2, 3))  # back to NCHW


# ------------------------------- param setup --------------------------------

def init_params(key, in_channels, out_channels):
    cmid = in_channels // 2
    ks = jax.random.split(key, 8)
    f32 = jnp.float32
    return {
        # ConvTranspose2d(in, in//2, 2, 2): weight (in, in//2, 2, 2)
        "up_w": 0.1 * jax.random.normal(ks[0], (in_channels, cmid, 2, 2), f32),
        "up_b": 0.1 * jax.random.normal(ks[1], (cmid,), f32),
        # DoubleConv conv1: (out, in, 3, 3). c*_b kept for parity with nn.Conv2d but
        # intentionally unused: the bias cancels exactly under train-mode BatchNorm.
        "c1_w": 0.1 * jax.random.normal(ks[2], (out_channels, in_channels, 3, 3), f32),
        "c1_b": 0.1 * jax.random.normal(ks[3], (out_channels,), f32),
        "bn1_g": jnp.ones((out_channels,), f32),
        "bn1_b": jnp.zeros((out_channels,), f32),
        # DoubleConv conv2: (out, out, 3, 3)
        "c2_w": 0.1 * jax.random.normal(ks[4], (out_channels, out_channels, 3, 3), f32),
        "c2_b": 0.1 * jax.random.normal(ks[5], (out_channels,), f32),
        "bn2_g": jnp.ones((out_channels,), f32),
        "bn2_b": jnp.zeros((out_channels,), f32),
    }


# ----------------------------------- main ------------------------------------

if __name__ == "__main__":
    in_channels, out_channels = 8, 4

    key = jax.random.PRNGKey(0)
    k1, k2, kp = jax.random.split(key, 3)

    # x1: decoder feature (N, in_ch, H, W); x2: skip (N, in_ch//2, 2H, 2W)
    x1 = jax.random.normal(k1, (2, in_channels, 16, 16), jnp.float32)
    x2 = jax.random.normal(k2, (2, in_channels // 2, 32, 32), jnp.float32)

    params = init_params(kp, in_channels, out_channels)

    fwd = jax.jit(functools.partial(up_forward, params))
    out = fwd(x1, x2)
    jax.block_until_ready(out)

    assert out.shape == (2, out_channels, 32, 32), out.shape
    print("KERNEL_OK")
</pallas_src>

<mosaic_0001>
module attributes {stable_mosaic.version = 11 : i64} {
  func.func @_matmul_bias_kernel(%arg0: i32, %arg1: i32, %arg2: memref<16x8xbf16, #tpu.memory_space<vmem>>, %arg3: memref<8x512xbf16, #tpu.memory_space<vmem>>, %arg4: memref<16x1xf32, #tpu.memory_space<vmem>>, %arg5: memref<16x512xbf16, #tpu.memory_space<vmem>>, %arg6: memref<16x512xf32, #tpu.memory_space<vmem>>) attributes {dimension_semantics = [#tpu.dimension_semantics<parallel>, #tpu.dimension_semantics<arbitrary>], iteration_bounds = array<i64: 1, 1>, scalar_prefetch = 0 : i64, scratch_operands = 1 : i64, tpu.core_type = #tpu.core_type<tc>, window_params = [{transform_indices = @transform_0, window_bounds = array<i64: 16, 8>}, {transform_indices = @transform_1, window_bounds = array<i64: 8, 512>}, {pipeline_mode = #tpu.pipeline_mode<synchronous>, transform_indices = @transform_2, window_bounds = array<i64: 16, 1>}, {transform_indices = @transform_3, window_bounds = array<i64: 16, 512>}]} {
    %c0_i32 = arith.constant 0 : i32
    %0 = arith.cmpi eq, %arg1, %c0_i32 : i32
    %1 = arith.extui %0 : i1 to i32
    %c0_i32_0 = arith.constant 0 : i32
    %2 = arith.cmpi ne, %1, %c0_i32_0 : i32
    scf.if %2 {
      %cst_10 = arith.constant 0.000000e+00 : f32
      %12 = vector.broadcast %cst_10 : f32 to vector<16x512xf32>
      %c0_11 = arith.constant 0 : index
      %c0_12 = arith.constant 0 : index
      %13 = vector.load %arg6[%c0_11, %c0_12] : memref<16x512xf32, #tpu.memory_space<vmem>>, vector<16x512xf32>
      tpu.vector_store %arg6[%c0_11, %c0_12], %12 {strides = array<i32>} : memref<16x512xf32, #tpu.memory_space<vmem>>, vector<16x512xf32>,
    } else {
    }
    %c0 = arith.constant 0 : index
    %c0_1 = arith.constant 0 : index
    %3 = vector.load %arg6[%c0, %c0_1] : memref<16x512xf32, #tpu.memory_space<vmem>>, vector<16x512xf32>
    %c0_2 = arith.constant 0 : index
    %c0_3 = arith.constant 0 : index
    %4 = vector.load %arg2[%c0_2, %c0_3] : memref<16x8xbf16, #tpu.memory_space<vmem>>, vector<16x8xbf16>
    %c0_4 = arith.constant 0 : index
    %c0_5 = arith.constant 0 : index
    %5 = vector.load %arg3[%c0_4, %c0_5] : memref<8x512xbf16, #tpu.memory_space<vmem>>, vector<8x512xbf16>
    %cst = arith.constant dense<0.000000e+00> : vector<16x512xf32>
    %6 = tpu.matmul %4, %5, %cst {dimension_numbers = #tpu.dot_dimension_numbers<[1], [0], [0], [1], [0, 0, 1, 1], [], []>} : vector<16x8xbf16>, vector<8x512xbf16>, vector<16x512xf32> -> vector<16x512xf32>
    %7 = arith.addf %3, %6 : vector<16x512xf32>
    %c0_6 = arith.constant 0 : index
    %c0_7 = arith.constant 0 : index
    %8 = vector.load %arg6[%c0_6, %c0_7] : memref<16x512xf32, #tpu.memory_space<vmem>>, vector<16x512xf32>
    tpu.vector_store %arg6[%c0_6, %c0_7], %7 {strides = array<i32>} : memref<16x512xf32, #tpu.memory_space<vmem>>, vector<16x512xf32>,
    %c0_i32_8 = arith.constant 0 : i32
    %9 = arith.cmpi eq, %arg1, %c0_i32_8 : i32
    %10 = arith.extui %9 : i1 to i32
    %c0_i32_9 = arith.constant 0 : i32
    %11 = arith.cmpi ne, %10, %c0_i32_9 : i32
    scf.if %11 {
      %c0_10 = arith.constant 0 : index
      %c0_11 = arith.constant 0 : index
      %12 = vector.load %arg6[%c0_10, %c0_11] : memref<16x512xf32, #tpu.memory_space<vmem>>, vector<16x512xf32>
      %c0_12 = arith.constant 0 : index
      %c0_13 = arith.constant 0 : index
      %13 = vector.load %arg4[%c0_12, %c0_13] : memref<16x1xf32, #tpu.memory_space<vmem>>, vector<16x1xf32>
      %14 = vector.broadcast %13 : vector<16x1xf32> to vector<16x512xf32>
      %15 = arith.addf %12, %14 : vector<16x512xf32>
      %16 = arith.truncf %15 : vector<16x512xf32> to vector<16x512xbf16>
      %c0_14 = arith.constant 0 : index
      %c0_15 = arith.constant 0 : index
      %17 = vector.load %arg5[%c0_14, %c0_15] : memref<16x512xbf16, #tpu.memory_space<vmem>>, vector<16x512xbf16>
      tpu.vector_store %arg5[%c0_14, %c0_15], %16 {strides = array<i32>} : memref<16x512xbf16, #tpu.memory_space<vmem>>, vector<16x512xbf16>,
    } else {
    }
    return
  }
  func.func @transform_0(%arg0: i32, %arg1: i32) -> (i32, i32) {
    %c0_i32 = arith.constant 0 : i32
    %c0_i32_0 = arith.constant 0 : i32
    return %c0_i32, %arg1 : i32, i32
  }
  func.func @transform_1(%arg0: i32, %arg1: i32) -> (i32, i32) {
    %c0_i32 = arith.constant 0 : i32
    return %arg1, %arg0 : i32, i32
  }
  func.func @transform_2(%arg0: i32, %arg1: i32) -> (i32, i32) {
    %c0_i32 = arith.constant 0 : i32
    %c0_i32_0 = arith.constant 0 : i32
    %c0_i32_1 = arith.constant 0 : i32
    return %c0_i32, %c0_i32_0 : i32, i32
  }
  func.func @transform_3(%arg0: i32, %arg1: i32) -> (i32, i32) {
    %c0_i32 = arith.constant 0 : i32
    %c0_i32_0 = arith.constant 0 : i32
    return %c0_i32, %arg0 : i32, i32
  }
}

module attributes {stable_mosaic.version = 11 : i64} {
  func.func @_bn_stats_kernel(%arg0: i32, %arg1: memref<4x512xf32, #tpu.memory_space<vmem>>, %arg2: memref<4x1xf32, #tpu.memory_space<vmem>>, %arg3: memref<4x1xf32, #tpu.memory_space<vmem>>, %arg4: memref<4x1xf32, #tpu.memory_space<vmem>>, %arg5: memref<4x1xf32, #tpu.memory_space<vmem>>, %arg6: memref<4x1xf32, #tpu.memory_space<vmem>>, %arg7: memref<4x1xf32, #tpu.memory_space<vmem>>) attributes {dimension_semantics = [#tpu.dimension_semantics<arbitrary>], iteration_bounds = array<i64: 4>, scalar_prefetch = 0 : i64, scratch_operands = 2 : i64, tpu.core_type = #tpu.core_type<tc>, window_params = [{transform_indices = @transform_0, window_bounds = array<i64: 4, 512>}, {pipeline_mode = #tpu.pipeline_mode<synchronous>, transform_indices = @transform_1, window_bounds = array<i64: 4, 1>}, {pipeline_mode = #tpu.pipeline_mode<synchronous>, transform_indices = @transform_2, window_bounds = array<i64: 4, 1>}, {pipeline_mode = #tpu.pipeline_mode<synchronous>, transform_indices = @transform_3, window_bounds = array<i64: 4, 1>}, {pipeline_mode = #tpu.pipeline_mode<synchronous>, transform_indices = @transform_4, window_bounds = array<i64: 4, 1>}]} {
    %c0_i32 = arith.constant 0 : i32
    %0 = arith.cmpi eq, %arg0, %c0_i32 : i32
    %1 = arith.extui %0 : i1 to i32
    %c0_i32_0 = arith.constant 0 : i32
    %2 = arith.cmpi ne, %1, %c0_i32_0 : i32
    scf.if %2 {
      %cst_12 = arith.constant 0.000000e+00 : f32
      %18 = vector.broadcast %cst_12 : f32 to vector<4x1xf32>
      %c0_13 = arith.constant 0 : index
      %c0_14 = arith.constant 0 : index
      %19 = vector.load %arg6[%c0_13, %c0_14] : memref<4x1xf32, #tpu.memory_space<vmem>>, vector<4x1xf32>
      tpu.vector_store %arg6[%c0_13, %c0_14], %18 {strides = array<i32>} : memref<4x1xf32, #tpu.memory_space<vmem>>, vector<4x1xf32>,
      %cst_15 = arith.constant 0.000000e+00 : f32
      %20 = vector.broadcast %cst_15 : f32 to vector<4x1xf32>
      %c0_16 = arith.constant 0 : index
      %c0_17 = arith.constant 0 : index
      %21 = vector.load %arg7[%c0_16, %c0_17] : memref<4x1xf32, #tpu.memory_space<vmem>>, vector<4x1xf32>
      tpu.vector_store %arg7[%c0_16, %c0_17], %20 {strides = array<i32>} : memref<4x1xf32, #tpu.memory_space<vmem>>, vector<4x1xf32>,
    } else {
    }
    %c0 = arith.constant 0 : index
    %c0_1 = arith.constant 0 : index
    %3 = vector.load %arg1[%c0, %c0_1] : memref<4x512xf32, #tpu.memory_space<vmem>>, vector<4x512xf32>
    %c0_2 = arith.constant 0 : index
    %c0_3 = arith.constant 0 : index
    %4 = vector.load %arg6[%c0_2, %c0_3] : memref<4x1xf32, #tpu.memory_space<vmem>>, vector<4x1xf32>
    %cst = arith.constant dense<0.000000e+00> : vector<4xf32>
    %5 = vector.multi_reduction <add>, %3, %cst [1] : vector<4x512xf32> to vector<4xf32>
    %6 = vector.shape_cast %5 : vector<4xf32> to vector<4x1xf32>
    %7 = arith.addf %4, %6 : vector<4x1xf32>
    %c0_4 = arith.constant 0 : index
    %c0_5 = arith.constant 0 : index
    %8 = vector.load %arg6[%c0_4, %c0_5] : memref<4x1xf32, #tpu.memory_space<vmem>>, vector<4x1xf32>
    tpu.vector_store %arg6[%c0_4, %c0_5], %7 {strides = array<i32>} : memref<4x1xf32, #tpu.memory_space<vmem>>, vector<4x1xf32>,
    %c0_6 = arith.constant 0 : index
    %c0_7 = arith.constant 0 : index
    %9 = vector.load %arg7[%c0_6, %c0_7] : memref<4x1xf32, #tpu.memory_space<vmem>>, vector<4x1xf32>
    %10 = arith.mulf %3, %3 : vector<4x512xf32>
    %cst_8 = arith.constant dense<0.000000e+00> : vector<4xf32>
    %11 = vector.multi_reduction <add>, %10, %cst_8 [1] : vector<4x512xf32> to vector<4xf32>
    %12 = vector.shape_cast %11 : vector<4xf32> to vector<4x1xf32>
    %13 = arith.addf %9, %12 : vector<4x1xf32>
    %c0_9 = arith.constant 0 : index
    %c0_10 = arith.constant 0 : index
    %14 = vector.load %arg7[%c0_9, %c0_10] : memref<4x1xf32, #tpu.memory_space<vmem>>, vector<4x1xf32>
    tpu.vector_store %arg7[%c0_9, %c0_10], %13 {strides = array<i32>} : memref<4x1xf32, #tpu.memory_space<vmem>>, vector<4x1xf32>,
    %c3_i32 = arith.constant 3 : i32
    %15 = arith.cmpi eq, %arg0, %c3_i32 : i32
    %16 = arith.extui %15 : i1 to i32
    %c0_i32_11 = arith.constant 0 : i32
    %17 = arith.cmpi ne, %16, %c0_i32_11 : i32
    scf.if %17 {
      %c0_12 = arith.constant 0 : index
      %c0_13 = arith.constant 0 : index
      %18 = vector.load %arg6[%c0_12, %c0_13] : memref<4x1xf32, #tpu.memory_space<vmem>>, vector<4x1xf32>
      %cst_14 = arith.constant 4.8828125E-4 : f32
      %19 = vector.broadcast %cst_14 : f32 to vector<4x1xf32>
      %20 = arith.mulf %18, %19 : vector<4x1xf32>
      %c0_15 = arith.constant 0 : index
      %c0_16 = arith.constant 0 : index
      %21 = vector.load %arg7[%c0_15, %c0_16] : memref<4x1xf32, #tpu.memory_space<vmem>>, vector<4x1xf32>
      %cst_17 = arith.constant 4.8828125E-4 : f32
      %22 = vector.broadcast %cst_17 : f32 to vector<4x1xf32>
      %23 = arith.mulf %21, %22 : vector<4x1xf32>
      %24 = arith.mulf %20, %20 : vector<4x1xf32>
      %25 = arith.subf %23, %24 : vector<4x1xf32>
      %cst_18 = arith.constant 0.000000e+00 : f32
      %26 = vector.broadcast %cst_18 : f32 to vector<4x1xf32>
      %27 = arith.maximumf %25, %26 : vector<4x1xf32>
      %c0_19 = arith.constant 0 : index
      %c0_20 = arith.constant 0 : index
      %28 = vector.load %arg2[%c0_19, %c0_20] : memref<4x1xf32, #tpu.memory_space<vmem>>, vector<4x1xf32>
      %cst_21 = arith.constant 9.99999974E-6 : f32
      %29 = vector.broadcast %cst_21 : f32 to vector<4x1xf32>
      %30 = arith.addf %27, %29 : vector<4x1xf32>
      %31 = math.rsqrt %30 : vector<4x1xf32>
      %32 = arith.mulf %28, %31 : vector<4x1xf32>
      %c0_22 = arith.constant 0 : index
      %c0_23 = arith.constant 0 : index
      %33 = vector.load %arg4[%c0_22, %c0_23] : memref<4x1xf32, #tpu.memory_space<vmem>>, vector<4x1xf32>
      tpu.vector_store %arg4[%c0_22, %c0_23], %32 {strides = array<i32>} : memref<4x1xf32, #tpu.memory_space<vmem>>, vector<4x1xf32>,
      %c0_24 = arith.constant 0 : index
      %c0_25 = arith.constant 0 : index
      %34 = vector.load %arg3[%c0_24, %c0_25] : memref<4x1xf32, #tpu.memory_space<vmem>>, vector<4x1xf32>
      %35 = arith.mulf %20, %32 : vector<4x1xf32>
      %36 = arith.subf %34, %35 : vector<4x1xf32>
      %c0_26 = arith.constant 0 : index
      %c0_27 = arith.constant 0 : index
      %37 = vector.load %arg5[%c0_26, %c0_27] : memref<4x1xf32, #tpu.memory_space<vmem>>, vector<4x1xf32>
      tpu.vector_store %arg5[%c0_26, %c0_27], %36 {strides = array<i32>} : memref<4x1xf32, #tpu.memory_space<vmem>>, vector<4x1xf32>,
    } else {
    }
    return
  }
  func.func @transform_0(%arg0: i32) -> (i32, i32) {
    %c0_i32 = arith.constant 0 : i32
    %c0_i32_0 = arith.constant 0 : i32
    return %c0_i32, %arg0 : i32, i32
  }
  func.func @transform_1(%arg0: i32) -> (i32, i32) {
    %c0_i32 = arith.constant 0 : i32
    %c0_i32_0 = arith.constant 0 : i32
    %c0_i32_1 = arith.constant 0 : i32
    return %c0_i32, %c0_i32_0 : i32, i32
  }
  func.func @transform_2(%arg0: i32) -> (i32, i32) {
    %c0_i32 = arith.constant 0 : i32
    %c0_i32_0 = arith.constant 0 : i32
    %c0_i32_1 = arith.constant 0 : i32
    return %c0_i32, %c0_i32_0 : i32, i32
  }
  func.func @transform_3(%arg0: i32) -> (i32, i32) {
    %c0_i32 = arith.constant 0 : i32
    %c0_i32_0 = arith.constant 0 : i32
    %c0_i32_1 = arith.constant 0 : i32
    return %c0_i32, %c0_i32_0 : i32, i32
  }
  func.func @transform_4(%arg0: i32) -> (i32, i32) {
    %c0_i32 = arith.constant 0 : i32
    %c0_i32_0 = arith.constant 0 : i32
    %c0_i32_1 = arith.constant 0 : i32
    return %c0_i32, %c0_i32_0 : i32, i32
  }
}

module attributes {stable_mosaic.version = 11 : i64} {
  func.func @_matmul_kernel(%arg0: i32, %arg1: i32, %arg2: memref<4x72xbf16, #tpu.memory_space<vmem>>, %arg3: memref<72x512xbf16, #tpu.memory_space<vmem>>, %arg4: memref<4x512xf32, #tpu.memory_space<vmem>>, %arg5: memref<4x512xf32, #tpu.memory_space<vmem>>) attributes {dimension_semantics = [#tpu.dimension_semantics<parallel>, #tpu.dimension_semantics<arbitrary>], iteration_bounds = array<i64: 4, 1>, scalar_prefetch = 0 : i64, scratch_operands = 1 : i64, tpu.core_type = #tpu.core_type<tc>, window_params = [{transform_indices = @transform_0, window_bounds = array<i64: 4, 72>}, {transform_indices = @transform_1, window_bounds = array<i64: 72, 512>}, {transform_indices = @transform_2, window_bounds = array<i64: 4, 512>}]} {
    %c0_i32 = arith.constant 0 : i32
    %0 = arith.cmpi eq, %arg1, %c0_i32 : i32
    %1 = arith.extui %0 : i1 to i32
    %c0_i32_0 = arith.constant 0 : i32
    %2 = arith.cmpi ne, %1, %c0_i32_0 : i32
    scf.if %2 {
      %cst_10 = arith.constant 0.000000e+00 : f32
      %12 = vector.broadcast %cst_10 : f32 to vector<4x512xf32>
      %c0_11 = arith.constant 0 : index
      %c0_12 = arith.constant 0 : index
      %13 = vector.load %arg5[%c0_11, %c0_12] : memref<4x512xf32, #tpu.memory_space<vmem>>, vector<4x512xf32>
      tpu.vector_store %arg5[%c0_11, %c0_12], %12 {strides = array<i32>} : memref<4x512xf32, #tpu.memory_space<vmem>>, vector<4x512xf32>,
    } else {
    }
    %c0 = arith.constant 0 : index
    %c0_1 = arith.constant 0 : index
    %3 = vector.load %arg5[%c0, %c0_1] : memref<4x512xf32, #tpu.memory_space<vmem>>, vector<4x512xf32>
    %c0_2 = arith.constant 0 : index
    %c0_3 = arith.constant 0 : index
    %4 = vector.load %arg2[%c0_2, %c0_3] : memref<4x72xbf16, #tpu.memory_space<vmem>>, vector<4x72xbf16>
    %c0_4 = arith.constant 0 : index
    %c0_5 = arith.constant 0 : index
    %5 = vector.load %arg3[%c0_4, %c0_5] : memref<72x512xbf16, #tpu.memory_space<vmem>>, vector<72x512xbf16>
    %cst = arith.constant dense<0.000000e+00> : vector<4x512xf32>
    %6 = tpu.matmul %4, %5, %cst {dimension_numbers = #tpu.dot_dimension_numbers<[1], [0], [0], [1], [0, 0, 1, 1], [], []>} : vector<4x72xbf16>, vector<72x512xbf16>, vector<4x512xf32> -> vector<4x512xf32>
    %7 = arith.addf %3, %6 : vector<4x512xf32>
    %c0_6 = arith.constant 0 : index
    %c0_7 = arith.constant 0 : index
    %8 = vector.load %arg5[%c0_6, %c0_7] : memref<4x512xf32, #tpu.memory_space<vmem>>, vector<4x512xf32>
    tpu.vector_store %arg5[%c0_6, %c0_7], %7 {strides = array<i32>} : memref<4x512xf32, #tpu.memory_space<vmem>>, vector<4x512xf32>,
    %c0_i32_8 = arith.constant 0 : i32
    %9 = arith.cmpi eq, %arg1, %c0_i32_8 : i32
    %10 = arith.extui %9 : i1 to i32
    %c0_i32_9 = arith.constant 0 : i32
    %11 = arith.cmpi ne, %10, %c0_i32_9 : i32
    scf.if %11 {
      %c0_10 = arith.constant 0 : index
      %c0_11 = arith.constant 0 : index
      %12 = vector.load %arg5[%c0_10, %c0_11] : memref<4x512xf32, #tpu.memory_space<vmem>>, vector<4x512xf32>
      %c0_12 = arith.constant 0 : index
      %c0_13 = arith.constant 0 : index
      %13 = vector.load %arg4[%c0_12, %c0_13] : memref<4x512xf32, #tpu.memory_space<vmem>>, vector<4x512xf32>
      tpu.vector_store %arg4[%c0_12, %c0_13], %12 {strides = array<i32>} : memref<4x512xf32, #tpu.memory_space<vmem>>, vector<4x512xf32>,
    } else {
    }
    return
  }
  func.func @transform_0(%arg0: i32, %arg1: i32) -> (i32, i32) {
    %c0_i32 = arith.constant 0 : i32
    %c0_i32_0 = arith.constant 0 : i32
    return %c0_i32, %arg1 : i32, i32
  }
  func.func @transform_1(%arg0: i32, %arg1: i32) -> (i32, i32) {
    %c0_i32 = arith.constant 0 : i32
    return %arg1, %arg0 : i32, i32
  }
  func.func @transform_2(%arg0: i32, %arg1: i32) -> (i32, i32) {
    %c0_i32 = arith.constant 0 : i32
    %c0_i32_0 = arith.constant 0 : i32
    return %c0_i32, %arg0 : i32, i32
  }
}

module attributes {stable_mosaic.version = 11 : i64} {
  func.func @_bn_apply_relu_kernel(%arg0: i32, %arg1: memref<4x512xf32, #tpu.memory_space<vmem>>, %arg2: memref<4x1xf32, #tpu.memory_space<vmem>>, %arg3: memref<4x1xf32, #tpu.memory_space<vmem>>, %arg4: memref<4x512xbf16, #tpu.memory_space<vmem>>) attributes {dimension_semantics = [#tpu.dimension_semantics<parallel>], iteration_bounds = array<i64: 4>, scalar_prefetch = 0 : i64, scratch_operands = 0 : i64, tpu.core_type = #tpu.core_type<tc>, window_params = [{transform_indices = @transform_0, window_bounds = array<i64: 4, 512>}, {pipeline_mode = #tpu.pipeline_mode<synchronous>, transform_indices = @transform_1, window_bounds = array<i64: 4, 1>}, {pipeline_mode = #tpu.pipeline_mode<synchronous>, transform_indices = @transform_2, window_bounds = array<i64: 4, 1>}, {transform_indices = @transform_3, window_bounds = array<i64: 4, 512>}]} {
    %c0 = arith.constant 0 : index
    %c0_0 = arith.constant 0 : index
    %0 = vector.load %arg1[%c0, %c0_0] : memref<4x512xf32, #tpu.memory_space<vmem>>, vector<4x512xf32>
    %c0_1 = arith.constant 0 : index
    %c0_2 = arith.constant 0 : index
    %1 = vector.load %arg2[%c0_1, %c0_2] : memref<4x1xf32, #tpu.memory_space<vmem>>, vector<4x1xf32>
    %2 = vector.broadcast %1 : vector<4x1xf32> to vector<4x512xf32>
    %3 = arith.mulf %0, %2 : vector<4x512xf32>
    %c0_3 = arith.constant 0 : index
    %c0_4 = arith.constant 0 : index
    %4 = vector.load %arg3[%c0_3, %c0_4] : memref<4x1xf32, #tpu.memory_space<vmem>>, vector<4x1xf32>
    %5 = vector.broadcast %4 : vector<4x1xf32> to vector<4x512xf32>
    %6 = arith.addf %3, %5 : vector<4x512xf32>
    %cst = arith.constant 0.000000e+00 : f32
    %7 = vector.broadcast %cst : f32 to vector<4x512xf32>
    %8 = arith.maximumf %6, %7 : vector<4x512xf32>
    %9 = arith.truncf %8 : vector<4x512xf32> to vector<4x512xbf16>
    %c0_5 = arith.constant 0 : index
    %c0_6 = arith.constant 0 : index
    %10 = vector.load %arg4[%c0_5, %c0_6] : memref<4x512xbf16, #tpu.memory_space<vmem>>, vector<4x512xbf16>
    tpu.vector_store %arg4[%c0_5, %c0_6], %9 {strides = array<i32>} : memref<4x512xbf16, #tpu.memory_space<vmem>>, vector<4x512xbf16>,
    return
  }
  func.func @transform_0(%arg0: i32) -> (i32, i32) {
    %c0_i32 = arith.constant 0 : i32
    %c0_i32_0 = arith.constant 0 : i32
    return %c0_i32, %arg0 : i32, i32
  }
  func.func @transform_1(%arg0: i32) -> (i32, i32) {
    %c0_i32 = arith.constant 0 : i32
    %c0_i32_0 = arith.constant 0 : i32
    %c0_i32_1 = arith.constant 0 : i32
    return %c0_i32, %c0_i32_0 : i32, i32
  }
  func.func @transform_2(%arg0: i32) -> (i32, i32) {
    %c0_i32 = arith.constant 0 : i32
    %c0_i32_0 = arith.constant 0 : i32
    %c0_i32_1 = arith.constant 0 : i32
    return %c0_i32, %c0_i32_0 : i32, i32
  }
  func.func @transform_3(%arg0: i32) -> (i32, i32) {
    %c0_i32 = arith.constant 0 : i32
    %c0_i32_0 = arith.constant 0 : i32
    return %c0_i32, %arg0 : i32, i32
  }
}

module attributes {stable_mosaic.version = 11 : i64} {
  func.func @_matmul_kernel(%arg0: i32, %arg1: i32, %arg2: memref<4x36xbf16, #tpu.memory_space<vmem>>, %arg3: memref<36x512xbf16, #tpu.memory_space<vmem>>, %arg4: memref<4x512xf32, #tpu.memory_space<vmem>>, %arg5: memref<4x512xf32, #tpu.memory_space<vmem>>) attributes {dimension_semantics = [#tpu.dimension_semantics<parallel>, #tpu.dimension_semantics<arbitrary>], iteration_bounds = array<i64: 4, 1>, scalar_prefetch = 0 : i64, scratch_operands = 1 : i64, tpu.core_type = #tpu.core_type<tc>, window_params = [{transform_indices = @transform_0, window_bounds = array<i64: 4, 36>}, {transform_indices = @transform_1, window_bounds = array<i64: 36, 512>}, {transform_indices = @transform_2, window_bounds = array<i64: 4, 512>}]} {
    %c0_i32 = arith.constant 0 : i32
    %0 = arith.cmpi eq, %arg1, %c0_i32 : i32
    %1 = arith.extui %0 : i1 to i32
    %c0_i32_0 = arith.constant 0 : i32
    %2 = arith.cmpi ne, %1, %c0_i32_0 : i32
    scf.if %2 {
      %cst_10 = arith.constant 0.000000e+00 : f32
      %12 = vector.broadcast %cst_10 : f32 to vector<4x512xf32>
      %c0_11 = arith.constant 0 : index
      %c0_12 = arith.constant 0 : index
      %13 = vector.load %arg5[%c0_11, %c0_12] : memref<4x512xf32, #tpu.memory_space<vmem>>, vector<4x512xf32>
      tpu.vector_store %arg5[%c0_11, %c0_12], %12 {strides = array<i32>} : memref<4x512xf32, #tpu.memory_space<vmem>>, vector<4x512xf32>,
    } else {
    }
    %c0 = arith.constant 0 : index
    %c0_1 = arith.constant 0 : index
    %3 = vector.load %arg5[%c0, %c0_1] : memref<4x512xf32, #tpu.memory_space<vmem>>, vector<4x512xf32>
    %c0_2 = arith.constant 0 : index
    %c0_3 = arith.constant 0 : index
    %4 = vector.load %arg2[%c0_2, %c0_3] : memref<4x36xbf16, #tpu.memory_space<vmem>>, vector<4x36xbf16>
    %c0_4 = arith.constant 0 : index
    %c0_5 = arith.constant 0 : index
    %5 = vector.load %arg3[%c0_4, %c0_5] : memref<36x512xbf16, #tpu.memory_space<vmem>>, vector<36x512xbf16>
    %cst = arith.constant dense<0.000000e+00> : vector<4x512xf32>
    %6 = tpu.matmul %4, %5, %cst {dimension_numbers = #tpu.dot_dimension_numbers<[1], [0], [0], [1], [0, 0, 1, 1], [], []>} : vector<4x36xbf16>, vector<36x512xbf16>, vector<4x512xf32> -> vector<4x512xf32>
    %7 = arith.addf %3, %6 : vector<4x512xf32>
    %c0_6 = arith.constant 0 : index
    %c0_7 = arith.constant 0 : index
    %8 = vector.load %arg5[%c0_6, %c0_7] : memref<4x512xf32, #tpu.memory_space<vmem>>, vector<4x512xf32>
    tpu.vector_store %arg5[%c0_6, %c0_7], %7 {strides = array<i32>} : memref<4x512xf32, #tpu.memory_space<vmem>>, vector<4x512xf32>,
    %c0_i32_8 = arith.constant 0 : i32
    %9 = arith.cmpi eq, %arg1, %c0_i32_8 : i32
    %10 = arith.extui %9 : i1 to i32
    %c0_i32_9 = arith.constant 0 : i32
    %11 = arith.cmpi ne, %10, %c0_i32_9 : i32
    scf.if %11 {
      %c0_10 = arith.constant 0 : index
      %c0_11 = arith.constant 0 : index
      %12 = vector.load %arg5[%c0_10, %c0_11] : memref<4x512xf32, #tpu.memory_space<vmem>>, vector<4x512xf32>
      %c0_12 = arith.constant 0 : index
      %c0_13 = arith.constant 0 : index
      %13 = vector.load %arg4[%c0_12, %c0_13] : memref<4x512xf32, #tpu.memory_space<vmem>>, vector<4x512xf32>
      tpu.vector_store %arg4[%c0_12, %c0_13], %12 {strides = array<i32>} : memref<4x512xf32, #tpu.memory_space<vmem>>, vector<4x512xf32>,
    } else {
    }
    return
  }
  func.func @transform_0(%arg0: i32, %arg1: i32) -> (i32, i32) {
    %c0_i32 = arith.constant 0 : i32
    %c0_i32_0 = arith.constant 0 : i32
    return %c0_i32, %arg1 : i32, i32
  }
  func.func @transform_1(%arg0: i32, %arg1: i32) -> (i32, i32) {
    %c0_i32 = arith.constant 0 : i32
    return %arg1, %arg0 : i32, i32
  }
  func.func @transform_2(%arg0: i32, %arg1: i32) -> (i32, i32) {
    %c0_i32 = arith.constant 0 : i32
    %c0_i32_0 = arith.constant 0 : i32
    return %c0_i32, %arg0 : i32, i32
  }
}

module attributes {stable_mosaic.version = 11 : i64} {
  func.func @_bn_apply_relu_kernel(%arg0: i32, %arg1: memref<4x512xf32, #tpu.memory_space<vmem>>, %arg2: memref<4x1xf32, #tpu.memory_space<vmem>>, %arg3: memref<4x1xf32, #tpu.memory_space<vmem>>, %arg4: memref<4x512xf32, #tpu.memory_space<vmem>>) attributes {dimension_semantics = [#tpu.dimension_semantics<parallel>], iteration_bounds = array<i64: 4>, scalar_prefetch = 0 : i64, scratch_operands = 0 : i64, tpu.core_type = #tpu.core_type<tc>, window_params = [{transform_indices = @transform_0, window_bounds = array<i64: 4, 512>}, {pipeline_mode = #tpu.pipeline_mode<synchronous>, transform_indices = @transform_1, window_bounds = array<i64: 4, 1>}, {pipeline_mode = #tpu.pipeline_mode<synchronous>, transform_indices = @transform_2, window_bounds = array<i64: 4, 1>}, {transform_indices = @transform_3, window_bounds = array<i64: 4, 512>}]} {
    %c0 = arith.constant 0 : index
    %c0_0 = arith.constant 0 : index
    %0 = vector.load %arg1[%c0, %c0_0] : memref<4x512xf32, #tpu.memory_space<vmem>>, vector<4x512xf32>
    %c0_1 = arith.constant 0 : index
    %c0_2 = arith.constant 0 : index
    %1 = vector.load %arg2[%c0_1, %c0_2] : memref<4x1xf32, #tpu.memory_space<vmem>>, vector<4x1xf32>
    %2 = vector.broadcast %1 : vector<4x1xf32> to vector<4x512xf32>
    %3 = arith.mulf %0, %2 : vector<4x512xf32>
    %c0_3 = arith.constant 0 : index
    %c0_4 = arith.constant 0 : index
    %4 = vector.load %arg3[%c0_3, %c0_4] : memref<4x1xf32, #tpu.memory_space<vmem>>, vector<4x1xf32>
    %5 = vector.broadcast %4 : vector<4x1xf32> to vector<4x512xf32>
    %6 = arith.addf %3, %5 : vector<4x512xf32>
    %cst = arith.constant 0.000000e+00 : f32
    %7 = vector.broadcast %cst : f32 to vector<4x512xf32>
    %8 = arith.maximumf %6, %7 : vector<4x512xf32>
    %c0_5 = arith.constant 0 : index
    %c0_6 = arith.constant 0 : index
    %9 = vector.load %arg4[%c0_5, %c0_6] : memref<4x512xf32, #tpu.memory_space<vmem>>, vector<4x512xf32>
    tpu.vector_store %arg4[%c0_5, %c0_6], %8 {strides = array<i32>} : memref<4x512xf32, #tpu.memory_space<vmem>>, vector<4x512xf32>,
    return
  }
  func.func @transform_0(%arg0: i32) -> (i32, i32) {
    %c0_i32 = arith.constant 0 : i32
    %c0_i32_0 = arith.constant 0 : i32
    return %c0_i32, %arg0 : i32, i32
  }
  func.func @transform_1(%arg0: i32) -> (i32, i32) {
    %c0_i32 = arith.constant 0 : i32
    %c0_i32_0 = arith.constant 0 : i32
    %c0_i32_1 = arith.constant 0 : i32
    return %c0_i32, %c0_i32_0 : i32, i32
  }
  func.func @transform_2(%arg0: i32) -> (i32, i32) {
    %c0_i32 = arith.constant 0 : i32
    %c0_i32_0 = arith.constant 0 : i32
    %c0_i32_1 = arith.constant 0 : i32
    return %c0_i32, %c0_i32_0 : i32, i32
  }
  func.func @transform_3(%arg0: i32) -> (i32, i32) {
    %c0_i32 = arith.constant 0 : i32
    %c0_i32_0 = arith.constant 0 : i32
    return %c0_i32, %arg0 : i32, i32
  }
}

</mosaic_0001>

<llo_original>
// kernel: tile.6
$region0: #{tile.6}
  #allocation2 [shape = 's32[1]{0}', space=sflag, size = 0x4, scoped, tag = 'scoped memory for tile.6']
  %s0 = inlined_call_operand.hbm [shape: f32[4], index: 0, kind: input, shape index: {}]
  %s1 = inlined_call_operand.vmem [shape: f32[4,4], index: 1, kind: output, shape index: {}]
  $region1: #{tile.6} parent=0
    #allocation0 [shape = 'u8[512]{0}', space=vmem, size = 0x400, scoped, tag = 'operand span for operand 0']
    #allocation1 [shape = 's32[1]{0}', space=sflag, size = 0x4, scoped, tag = 'scoped memory for tile.6']
    %2 = vsyncpa [#allocation1], 0
    // Predicated region
    $region2: #{tile.6} parent=1 // pred_check
      _
    $region3: #{tile.6} parent=1 // pred_check_branch
      %4 = sbr.rel (0) target = $region5
    $region4: #{tile.6} parent=1 // pred_region
      %6 = vsyncadd [#allocation1], 0
      %s8 = sshll.u32 %s0, 4
      %s9 = int_to_ptr.hbm [resolvable:$true] %s8
      %s10 = sshll.u32 [#allocation0], 4
      %s11 = int_to_ptr.vmem [resolvable:$true] %s10
      %13 = dma.hbm_to_vmem [thread:$0]  %s9, 16, %s11, [#allocation1]
    $region5: #{tile.6} parent=1 // pred_fallthru
      _
    // Predicated region
    $region6: #{tile.6} parent=1 // pred_check
      _
    $region7: #{tile.6} parent=1 // pred_check_branch
      %15 = sbr.rel (0) target = $region9
    $region8: #{tile.6} parent=1 // pred_region
      %17 = dma.done [#allocation1], 16
    $region9: #{tile.6} parent=1 // pred_fallthru
      _
    %v18 = vld [vmem:[#allocation0] ss:$0 sm:$0xff]
    %19 = vst [vmem:[%s1] sm:$0xf] %v18
    %20 = vsyncpa [#allocation1], 1

// kernel: tile.0
$region0: #{tile.0}
  %s0 = inlined_call_operand.vmem [shape: f32[4,4], index: 0, kind: input, shape index: {}]
  %s1 = inlined_call_operand.vmem [shape: f32[16,1], index: 1, kind: output, shape index: {}]
  $region1: #{tile.0} parent=0
    #allocation0 [shape = 'u8[4096]{0}', space=vmem, size = 0x1000, scoped, tag = 'scoped mem for input reshape']
    %s3 = ssub.s32 16, 1
    %v4 = vld [vmem:[%s0] sm:%s3]
    %5 = vst [vmem:[#allocation0] sm:%s3] %v4
    %v6 = vld [vmem:[#allocation0] sm:$0xf]
    %vm7 = vcmask 7168
    %8 = vst.msk [vmem:[%s1] ss:$4 sm:$0xf] %vm7, %v6
    %v9 = vld [vmem:[#allocation0] sm:$0xf]
    %10 = vrot.lane.b32.xlu0 %v9, 127
    %v11 = vpop.permute.xlu0 %10
    %vm12 = vcmask 7168
    %s13 = scalar_lea.vmem %s1, 1
    %14 = vst.msk [vmem:[%s13] ss:$4 sm:$0xf] %vm12, %v11
    %v15 = vld [vmem:[#allocation0] sm:$0xf]
    %16 = vrot.lane.b32.xlu0 %v15, 126
    %v17 = vpop.permute.xlu0 %16
    %vm18 = vcmask 7168
    %s19 = scalar_lea.vmem %s1, 2
    %20 = vst.msk [vmem:[%s19] ss:$4 sm:$0xf] %vm18, %v17
    %v21 = vld [vmem:[#allocation0] sm:$0xf]
    %22 = vrot.lane.b32.xlu0 %v21, 125
    %v23 = vpop.permute.xlu0 %22
    %vm24 = vcmask 7168
    %s25 = scalar_lea.vmem %s1, 3
    %26 = vst.msk [vmem:[%s25] ss:$4 sm:$0xf] %vm24, %v23

// kernel: up_forward.7
$region0: #{up_forward.7}
  #allocation0 [shape = 'u32[]', space=smem, size = 0x4, offset = 0x4, fixed_abs, tag = 'smem constant byte address 0x4 - core index']
  #allocation1 [shape = 'u32[72,128]{1,0:T(1,128)}', space=vmem, size = 0x9000, scoped, tag = 'internal scratch']
  #allocation2 [shape = 'f32[16,512]{1,0:T(8,128)}', space=vmem, size = 0x8000, scoped, tag = 'scratch operand']
  %s0 = inlined_call_operand.hbm [shape: bf16[16,8], index: 0, kind: input, shape index: {}]
  %s1 = inlined_call_operand.vmem [shape: bf16[8,512], index: 1, kind: input, shape index: {}]
  %s2 = inlined_call_operand.vmem [shape: f32[16,1], index: 2, kind: input, shape index: {}]
  %s3 = inlined_call_operand.vmem [shape: bf16[16,512], index: 3, kind: output, shape index: {}]
  %s4 = sld [smem:[#allocation0]]
  $region34: #{up_forward.7} parent=0
    _
  %s6 = ssub.s32 1, %s4
  %s7 = scalar_select 0, %s6, %s4
  $region1: #{up_forward.7} parent=0
    #allocation3 [shape = 'u8[4096]{0}', space=vmem, size = 0x1000, scoped, tag = 'input window, operand 0, single buffered']
    #allocation4 [shape = 's32[1]{0}', space=sflag, size = 0x4, scoped, tag = 'scoped memory for up_forward.7']
    %8 = vsyncpa [#allocation4], 0
    // Predicated region
    $region2: #{up_forward.7} parent=1 // pred_check
      _
    $region3: #{up_forward.7} parent=1 // pred_check_branch
      %10 = sbr.rel (0) target = $region5
    $region4: #{up_forward.7} parent=1 // pred_region
      %12 = vsyncadd [#allocation4], 0
      %s13 = sshll.u32 %s0, 4
      %s14 = int_to_ptr.hbm [resolvable:$true] %s13
      %s15 = sshll.u32 [#allocation3], 4
      %s16 = int_to_ptr.vmem [resolvable:$true] %s15
      %21 = dma.hbm_to_vmem [thread:$0]  %s14, 128, %s16, [#allocation4], 64, 64, 4
    $region5: #{up_forward.7} parent=1 // pred_fallthru
      _
    // Predicated region
    $region6: #{up_forward.7} parent=1 // pred_check
      _
    $region7: #{up_forward.7} parent=1 // pred_check_branch
      %23 = sbr.rel (0) target = $region9
    $region8: #{up_forward.7} parent=1 // pred_region
      _
    $region9: #{up_forward.7} parent=1 // pred_fallthru
      _
    // Predicated region
    $region10: #{up_forward.7} parent=1 // pred_check
      _
    $region11: #{up_forward.7} parent=1 // pred_check_branch
      %25 = sbr.rel (0) target = $region13
    $region12: #{up_forward.7} parent=1 // pred_region
      _
    $region13: #{up_forward.7} parent=1 // pred_fallthru
      _
    // Predicated region
    $region14: #{up_forward.7} parent=1 // pred_check
      _
    $region15: #{up_forward.7} parent=1 // pred_check_branch
      %27 = sbr.rel (0) target = $region17
    $region16: #{up_forward.7} parent=1 // pred_region
      %29 = dma.done [#allocation4], 128
    $region17: #{up_forward.7} parent=1 // pred_fallthru
      _
    %p31 = scmp.eq.s32.totalorder 0, 0
    // Predicated region
    $region18: #{up_forward.7} parent=1 // pred_check
      %p32 = pneg %p31
    $region19: #{up_forward.7} parent=1 // pred_check_branch
      %34 = sbr.rel (%p32) target = $region21
    $region20: #{up_forward.7} parent=1 // pred_region
      %35 = vst [vmem:[#allocation2] sm:$0xff] 0.0
      %36 = vst [vmem:[#allocation2 + $0x8] sm:$0xff] 0.0
      %37 = vst [vmem:[#allocation2 + $0x10] sm:$0xff] 0.0
      %38 = vst [vmem:[#allocation2 + $0x18] sm:$0xff] 0.0
      %39 = vst [vmem:[#allocation2 + $0x20] sm:$0xff] 0.0
      %40 = vst [vmem:[#allocation2 + $0x28] sm:$0xff] 0.0
      %41 = vst [vmem:[#allocation2 + $0x30] sm:$0xff] 0.0
      %42 = vst [vmem:[#allocation2 + $0x38] sm:$0xff] 0.0
    $region21: #{up_forward.7} parent=1 // pred_fallthru
      _
    %v43 = vld [vmem:[#allocation2] sm:$0xff]
    %v44 = vld [vmem:[#allocation2 + $0x8] sm:$0xff]
    %v45 = vld [vmem:[#allocation2 + $0x10] sm:$0xff]
    %v46 = vld [vmem:[#allocation2 + $0x18] sm:$0xff]
    %v47 = vld [vmem:[#allocation2 + $0x20] sm:$0xff]
    %v48 = vld [vmem:[#allocation2 + $0x28] sm:$0xff]
    %v49 = vld [vmem:[#allocation2 + $0x30] sm:$0xff]
    %v50 = vld [vmem:[#allocation2 + $0x38] sm:$0xff]
    %v51 = vld [vmem:[#allocation3] sm:$0xf]
    %v52 = vld [vmem:[#allocation3 + $0x4] sm:$0xf]
    %v53 = vld [vmem:[%s1] sm:$0xff]
    %v54 = vld [vmem:[%s1 + $0x8] sm:$0xff]
    %v57 = vunpack.c.l.b16 %v51
    %v58 = vunpack.c.l.b16 %v52
    %v59 = vpack.c.b16 %v58, %v57
    %v62 = vunpack.c.l.b16 %v53
    %v63 = vunpack.c.h.b16 %v53
    %v64 = vunpack.c.l.b16 %v54
    %v65 = vunpack.c.h.b16 %v54
    %v66 = vpack.c.b16 %v62, %v62
    %v67 = vpack.c.b16 %v63, %v63
    %v68 = vpack.c.b16 %v64, %v64
    %v69 = vpack.c.b16 %v65, %v65
    %vm70 = vcmask 64512
    %v72 = vsel %vm70, %v59, 0
    %vm74 = vcmask 1043456
    %v76 = vsel %vm74, %v66, 0
    %v79 = vsel %vm74, %v67, 0
    %v82 = vsel %vm74, %v68, 0
    %v85 = vsel %vm74, %v69, 0
    %87 = vmatpush.bf16.msra.mxu0 0
    %88 = vmatpush.bf16.msra.mxu0 0
    %89 = vmatpush.bf16.msra.mxu0 0
    %90 = vmatpush.bf16.msra.mxu0 0
    %91 = vmatpush.bf16.msra.mxu0 0
    %92 = vmatpush.bf16.msra.mxu0 0
    %93 = vmatpush.bf16.msra.mxu0 0
    %94 = vmatpush.bf16.msra.mxu0 %v76
    %95 = vmatmul.bf16.gmra.mxu0 %v72
    %v96 = vpop.f32.mrf.mxu0
    %v97 = vadd.f32 0.0, %v96
    %v98 = vpop.f32.mrf.mxu0
    %v99 = vadd.f32 0.0, %v98
    %100 = vdwg.mxu0
    %101 = vmatpush.bf16.msra.mxu0 0
    %102 = vmatpush.bf16.msra.mxu0 0
    %103 = vmatpush.bf16.msra.mxu0 0
    %104 = vmatpush.bf16.msra.mxu0 0
    %105 = vmatpush.bf16.msra.mxu0 0
    %106 = vmatpush.bf16.msra.mxu0 0
    %107 = vmatpush.bf16.msra.mxu0 0
    %108 = vmatpush.bf16.msra.mxu0 %v79
    %109 = vmatmul.bf16.gmra.mxu0 %v72
    %v110 = vpop.f32.mrf.mxu0
    %v111 = vadd.f32 0.0, %v110
    %v112 = vpop.f32.mrf.mxu0
    %v113 = vadd.f32 0.0, %v112
    %114 = vdwg.mxu0
    %115 = vmatpush.bf16.msra.mxu0 0
    %116 = vmatpush.bf16.msra.mxu0 0
    %117 = vmatpush.bf16.msra.mxu0 0
    %118 = vmatpush.bf16.msra.mxu0 0
    %119 = vmatpush.bf16.msra.mxu0 0
    %120 = vmatpush.bf16.msra.mxu0 0
    %121 = vmatpush.bf16.msra.mxu0 0
    %122 = vmatpush.bf16.msra.mxu0 %v82
    %123 = vmatmul.bf16.gmra.mxu0 %v72
    %v124 = vpop.f32.mrf.mxu0
    %v125 = vadd.f32 0.0, %v124
    %v126 = vpop.f32.mrf.mxu0
    %v127 = vadd.f32 0.0, %v126
    %128 = vdwg.mxu0
    %129 = vmatpush.bf16.msra.mxu0 0
    %130 = vmatpush.bf16.msra.mxu0 0
    %131 = vmatpush.bf16.msra.mxu0 0
    %132 = vmatpush.bf16.msra.mxu0 0
    %133 = vmatpush.bf16.msra.mxu0 0
    %134 = vmatpush.bf16.msra.mxu0 0
    %135 = vmatpush.bf16.msra.mxu0 0
    %136 = vmatpush.bf16.msra.mxu0 %v85
    %137 = vmatmul.bf16.gmra.mxu0 %v72
    %v138 = vpop.f32.mrf.mxu0
    %v139 = vadd.f32 0.0, %v138
    %v140 = vpop.f32.mrf.mxu0
    %v141 = vadd.f32 0.0, %v140
    %142 = vdwg.mxu0
    %v143 = vadd.f32 %v43, %v97
    %v144 = vadd.f32 %v44, %v111
    %v145 = vadd.f32 %v45, %v125
    %v146 = vadd.f32 %v46, %v139
    %v147 = vadd.f32 %v47, %v99
    %v148 = vadd.f32 %v48, %v113
    %v149 = vadd.f32 %v49, %v127
    %v150 = vadd.f32 %v50, %v141
    %151 = vst [vmem:[#allocation2] sm:$0xff] %v143
    %152 = vst [vmem:[#allocation2 + $0x8] sm:$0xff] %v144
    %153 = vst [vmem:[#allocation2 + $0x10] sm:$0xff] %v145
    %154 = vst [vmem:[#allocation2 + $0x18] sm:$0xff] %v146
    %155 = vst [vmem:[#allocation2 + $0x20] sm:$0xff] %v147
    %156 = vst [vmem:[#allocation2 + $0x28] sm:$0xff] %v148
    %157 = vst [vmem:[#allocation2 + $0x30] sm:$0xff] %v149
    %158 = vst [vmem:[#allocation2 + $0x38] sm:$0xff] %v150
    // Predicated region
    $region22: #{up_forward.7} parent=1 // pred_check
      %p159 = pneg %p31
    $region23: #{up_forward.7} parent=1 // pred_check_branch
      %161 = sbr.rel (%p159) target = $region25
    $region24: #{up_forward.7} parent=1 // pred_region
      %v162 = vld [vmem:[#allocation2] sm:$0xff]
      %v163 = vld [vmem:[#allocation2 + $0x8] sm:$0xff]
      %v164 = vld [vmem:[#allocation2 + $0x10] sm:$0xff]
      %v165 = vld [vmem:[#allocation2 + $0x18] sm:$0xff]
      %v166 = vld [vmem:[#allocation2 + $0x20] sm:$0xff]
      %v167 = vld [vmem:[#allocation2 + $0x28] sm:$0xff]
      %v168 = vld [vmem:[#allocation2 + $0x30] sm:$0xff]
      %v169 = vld [vmem:[#allocation2 + $0x38] sm:$0xff]
      %v170 = vld [vmem:[%s2] sm:$0xff]
      %v171 = vld [vmem:[%s2 + $0x8] sm:$0xff]
      %173 = vset.pattern.permute.xlu0 0
      %174 = vperm.xlu0 %173, %v170
      %v175 = vpop.permute.xlu0 %174
      %178 = vset.pattern.permute.xlu0 0
      %179 = vperm.xlu0 %178, %v171
      %v180 = vpop.permute.xlu0 %179
      %v182 = vadd.f32 %v162, %v175
      %v183 = vadd.f32 %v163, %v175
      %v184 = vadd.f32 %v164, %v175
      %v185 = vadd.f32 %v165, %v175
      %v186 = vadd.f32 %v166, %v180
      %v187 = vadd.f32 %v167, %v180
      %v188 = vadd.f32 %v168, %v180
      %v189 = vadd.f32 %v169, %v180
      %v190 = vpack.c.bf16 %v183, %v182
      %v191 = vpack.c.bf16 %v185, %v184
      %v192 = vpack.c.bf16 %v187, %v186
      %v193 = vpack.c.bf16 %v189, %v188
      %194 = vst [vmem:[%s3] sm:$0xff] %v190
      %195 = vst [vmem:[%s3 + $0x8] sm:$0xff] %v191
      %196 = vst [vmem:[%s3 + $0x10] sm:$0xff] %v192
      %197 = vst [vmem:[%s3 + $0x18] sm:$0xff] %v193
    $region25: #{up_forward.7} parent=1 // pred_fallthru
      _
    // Predicated region
    $region26: #{up_forward.7} parent=1 // pred_check
      _
    $region27: #{up_forward.7} parent=1 // pred_check_branch
      %199 = sbr.rel (0) target = $region29
    $region28: #{up_forward.7} parent=1 // pred_region
      _
    $region29: #{up_forward.7} parent=1 // pred_fallthru
      _
    // Predicated region
    $region30: #{up_forward.7} parent=1 // pred_check
      _
    $region31: #{up_forward.7} parent=1 // pred_check_branch
      %201 = sbr.rel (0) target = $region33
    $region32: #{up_forward.7} parent=1 // pred_region
      _
    $region33: #{up_forward.7} parent=1 // pred_fallthru
      _
    %202 = vsyncpa [#allocation4], 1

// kernel: up_forward.9
$region0: #{up_forward.9}
  #allocation0 [shape = 'u32[]', space=smem, size = 0x4, offset = 0x4, fixed_abs, tag = 'smem constant byte address 0x4 - core index']
  #allocation1 [shape = 'u32[72,128]{1,0:T(1,128)}', space=vmem, size = 0x9000, scoped, tag = 'internal scratch']
  #allocation2 [shape = 'f32[4,1]{1,0:T(4,128)}', space=vmem, size = 0x800, scoped, tag = 'scratch operand']
  #allocation3 [shape = 'f32[4,1]{1,0:T(4,128)}', space=vmem, size = 0x800, scoped, tag = 'scratch operand']
  %s0 = inlined_call_operand.vmem [shape: f32[4,2048], index: 0, kind: input, shape index: {}]
  %s1 = inlined_call_operand.vmem [shape: f32[4,1], index: 1, kind: input, shape index: {}]
  %s2 = inlined_call_operand.vmem [shape: f32[4,1], index: 2, kind: input, shape index: {}]
  %s3 = inlined_call_operand.vmem [shape: f32[4,1], index: 3, kind: output, shape index: {0}]
  %s4 = inlined_call_operand.vmem [shape: f32[4,1], index: 4, kind: output, shape index: {1}]
  %5 = xla_tuple %s3, %s4
  %s6 = sld [smem:[#allocation0]]
  $region61: #{up_forward.9} parent=0
    _
  %s8 = ssub.s32 1, %s6
  %s9 = scalar_select 0, %s8, %s6
  loop: start=0, step=1, limit=6
  $region2: #{up_forward.9} parent=0 // loop_pre_header
    _
  $region3: #{up_forward.9} parent=0 // loop_header
    %s11 = sphi 0, %s15
    %p12 = scmp.ge.s32.totalorder %s11, 6
    %s21 = sphi 0, %s23
    %s24 = sphi 0, %s21
    %s25 = sphi 0, %s24
    %s41 = sphi 0, %s25
    %s45 = sphi 0, %s45
    %s47 = sphi 0, %s45
    %s48 = sphi 0, %s47
    %s62 = sphi 0, %s48
    %s66 = sphi 0, %s66
    %s68 = sphi 0, %s66
    %s69 = sphi 0, %s68
    %s83 = sphi 0, %s69
    %s87 = sphi 0, %s87
    %s89 = sphi 0, %s87
    %s90 = sphi 0, %s89
    %s104 = sphi 0, %s90
    %s108 = sphi 0, %s108
    %s110 = sphi 0, %s108
    %s111 = sphi 0, %s110
    %s125 = sphi 0, %s111
  $region4: #{up_forward.9} parent=0 // loop_header_branch
    %14 = sbr.rel (%p12) target = $region8
  $region5: #{up_forward.9} parent=0 // loop_body
    %s16 = ssub.s32 %s11, 1
    %s17 = ssub.s32 %s11, 2
    %s18 = sadd.s32 %s11, 1
    %s19 = ssub.s32 %s11, %s18
    %p20 = scmp.eq.s32.totalorder %s19, 0
    %s22 = sadd.s32 %s21, 1
    %s23 = scalar_select %p20, %s21, %s22
    %p26 = pneg %p20
    %p27 = scmp.eq.s32.totalorder %s11, 3
    %p28 = por %p26, %p27
    %p29 = scmp.ne.s32.totalorder %s21, %s24
    %p30 = scmp.eq.s32.totalorder %s11, 0
    %p31 = por %p29, %p30
    %p32 = scmp.ne.s32.totalorder %s21, %s24
    %p33 = scmp.eq.s32.totalorder %s16, 3
    %p34 = por %p32, %p33
    %p35 = scmp.ne.s32.totalorder %s24, %s25
    %p36 = scmp.eq.s32.totalorder %s16, 0
    %p37 = por %p35, %p36
    %p38 = scmp.ne.s32.totalorder %s24, %s25
    %p39 = scmp.eq.s32.totalorder %s17, 3
    %p40 = por %p38, %p39
    %p42 = scmp.ne.s32.totalorder %s25, %s41
    %p43 = scmp.eq.s32.totalorder %s17, 0
    %p44 = por %p42, %p43
    %s46 = sadd.s32 %s45, 1
    %p49 = scmp.eq.s32.totalorder %s11, 3
    %p50 = scmp.ne.s32.totalorder %s45, %s47
    %p51 = scmp.eq.s32.totalorder %s11, 0
    %p52 = por %p50, %p51
    %p53 = scmp.ne.s32.totalorder %s45, %s47
    %p54 = scmp.eq.s32.totalorder %s16, 3
    %p55 = por %p53, %p54
    %p56 = scmp.ne.s32.totalorder %s47, %s48
    %p57 = scmp.eq.s32.totalorder %s16, 0
    %p58 = por %p56, %p57
    %p59 = scmp.ne.s32.totalorder %s47, %s48
    %p60 = scmp.eq.s32.totalorder %s17, 3
    %p61 = por %p59, %p60
    %p63 = scmp.ne.s32.totalorder %s48, %s62
    %p64 = scmp.eq.s32.totalorder %s17, 0
    %p65 = por %p63, %p64
    %s67 = sadd.s32 %s66, 1
    %p70 = scmp.eq.s32.totalorder %s11, 3
    %p71 = scmp.ne.s32.totalorder %s66, %s68
    %p72 = scmp.eq.s32.totalorder %s11, 0
    %p73 = por %p71, %p72
    %p74 = scmp.ne.s32.totalorder %s66, %s68
    %p75 = scmp.eq.s32.totalorder %s16, 3
    %p76 = por %p74, %p75
    %p77 = scmp.ne.s32.totalorder %s68, %s69
    %p78 = scmp.eq.s32.totalorder %s16, 0
    %p79 = por %p77, %p78
    %p80 = scmp.ne.s32.totalorder %s68, %s69
    %p81 = scmp.eq.s32.totalorder %s17, 3
    %p82 = por %p80, %p81
    %p84 = scmp.ne.s32.totalorder %s69, %s83
    %p85 = scmp.eq.s32.totalorder %s17, 0
    %p86 = por %p84, %p85
    %s88 = sadd.s32 %s87, 1
    %p91 = scmp.eq.s32.totalorder %s11, 3
    %p92 = scmp.ne.s32.totalorder %s87, %s89
    %p93 = scmp.eq.s32.totalorder %s11, 0
    %p94 = por %p92, %p93
    %p95 = scmp.ne.s32.totalorder %s87, %s89
    %p96 = scmp.eq.s32.totalorder %s16, 3
    %p97 = por %p95, %p96
    %p98 = scmp.ne.s32.totalorder %s89, %s90
    %p99 = scmp.eq.s32.totalorder %s16, 0
    %p100 = por %p98, %p99
    %p101 = scmp.ne.s32.totalorder %s89, %s90
    %p102 = scmp.eq.s32.totalorder %s17, 3
    %p103 = por %p101, %p102
    %p105 = scmp.ne.s32.totalorder %s90, %s104
    %p106 = scmp.eq.s32.totalorder %s17, 0
    %p107 = por %p105, %p106
    %s109 = sadd.s32 %s108, 1
    %p112 = scmp.eq.s32.totalorder %s11, 3
    %p113 = scmp.ne.s32.totalorder %s108, %s110
    %p114 = scmp.eq.s32.totalorder %s11, 0
    %p115 = por %p113, %p114
    %p116 = scmp.ne.s32.totalorder %s108, %s110
    %p117 = scmp.eq.s32.totalorder %s16, 3
    %p118 = por %p116, %p117
    %p119 = scmp.ne.s32.totalorder %s110, %s111
    %p120 = scmp.eq.s32.totalorder %s16, 0
    %p121 = por %p119, %p120
    %p122 = scmp.ne.s32.totalorder %s110, %s111
    %p123 = scmp.eq.s32.totalorder %s17, 3
    %p124 = por %p122, %p123
    %p126 = scmp.ne.s32.totalorder %s111, %s125
    %p127 = scmp.eq.s32.totalorder %s17, 0
    %p128 = por %p126, %p127
    %p129 = scmp.le.s32.totalorder 1, %s11
    %p130 = scmp.lt.s32.totalorder %s11, 5
    %p131 = pnand %p129, %p130
    %p132 = pneg %p131
    // Predicated region
    $region9: #{up_forward.9} parent=5 // pred_check
      _
    $region10: #{up_forward.9} parent=5 // pred_check_branch
      %134 = sbr.rel (%p131) target = $region12
    $region11: #{up_forward.9} parent=5 // pred_region
      %s135 = ssub.s32 %s11, 1
      // Predicated region
      $region13: #{up_forward.9} parent=11 // pred_check
        %p136 = pneg %p58
      $region14: #{up_forward.9} parent=11 // pred_check_branch
        %138 = sbr.rel (%p136) target = $region16
      $region15: #{up_forward.9} parent=11 // pred_region
        _
      $region16: #{up_forward.9} parent=11 // pred_fallthru
        _
      // Predicated region
      $region17: #{up_forward.9} parent=11 // pred_check
        %p139 = pneg %p79
      $region18: #{up_forward.9} parent=11 // pred_check_branch
        %141 = sbr.rel (%p139) target = $region20
      $region19: #{up_forward.9} parent=11 // pred_region
        _
      $region20: #{up_forward.9} parent=11 // pred_fallthru
        _
    $region12: #{up_forward.9} parent=5 // pred_fallthru
      _
    %p142 = scmp.lt.s32.totalorder %s11, 4
    // Predicated region
    $region21: #{up_forward.9} parent=5 // pred_check
      %p143 = pneg %p142
    $region22: #{up_forward.9} parent=5 // pred_check_branch
      %145 = sbr.rel (%p143) target = $region24
    $region23: #{up_forward.9} parent=5 // pred_region
      // Predicated region
      $region25: #{up_forward.9} parent=23 // pred_check
        %p146 = pneg %p31
      $region26: #{up_forward.9} parent=23 // pred_check_branch
        %148 = sbr.rel (%p146) target = $region28
      $region27: #{up_forward.9} parent=23 // pred_region
        %s149 = smul.u32 4, %s11
        %p150 = scmp.lt.s32.totalorder %s149, 15
        %s151 = scalar_select %p150, %s149, 15
        %s152 = smul.addr %s151, 4
        %s153 = scalar_lea.vmem %s0, %s152
        %s154 = smul.u32 4, %s11
      $region28: #{up_forward.9} parent=23 // pred_fallthru
        _
    $region24: #{up_forward.9} parent=5 // pred_fallthru
      _
    %p155 = scmp.le.s32.totalorder 1, %s11
    %p156 = scmp.lt.s32.totalorder %s11, 5
    %p157 = pnand %p155, %p156
    %p158 = pneg %p157
    // Predicated region
    $region29: #{up_forward.9} parent=5 // pred_check
      _
    $region30: #{up_forward.9} parent=5 // pred_check_branch
      %160 = sbr.rel (%p157) target = $region32
    $region31: #{up_forward.9} parent=5 // pred_region
      %s161 = ssub.s32 %s11, 1
      %s162 = smul.u32 4, %s16
      %p163 = scmp.lt.s32.totalorder %s162, 15
      %s164 = scalar_select %p163, %s162, 15
      %s165 = smul.addr %s164, 4
      %s166 = scalar_lea.vmem %s0, %s165
      %p167 = pneg %p37
      %p168 = pneg %p34
      %p169 = pneg %p58
      %p170 = pneg %p55
      %p171 = pneg %p79
      %p172 = pneg %p76
      %p173 = pneg %p100
      %p174 = pneg %p97
      %p175 = pneg %p121
      %p176 = pneg %p118
      %s177 = smul.u32 4, %s16
      %p178 = scmp.lt.s32.totalorder %s177, 15
      %s179 = scalar_select %p178, %s177, 15
      %s180 = smul.addr %s179, 4
      %s181 = scalar_lea.vmem %s0, %s180
      %s182 = smul.u32 4, %s16
      %p183 = scmp.eq.s32.totalorder %s16, 0
      // Predicated region
      $region33: #{up_forward.9} parent=31 // pred_check
        %p184 = pneg %p183
      $region34: #{up_forward.9} parent=31 // pred_check_branch
        %186 = sbr.rel (%p184) target = $region36
      $region35: #{up_forward.9} parent=31 // pred_region
        %vm187 = vcmask 3072
        %188 = vst.msk [vmem:[#allocation2] sm:$0xf] %vm187, 0.0
        %189 = vst.msk [vmem:[#allocation3] sm:$0xf] %vm187, 0.0
      $region36: #{up_forward.9} parent=31 // pred_fallthru
        _
      %v190 = vld [vmem:[%s181] sm:$0xff]
      %v191 = vld [vmem:[%s181 + $0x8] sm:$0xff]
      %v192 = vld [vmem:[#allocation2] sm:$0xf]
      %195 = vst [vmem:[#allocation1] ss:$2 sm:$0xff] %v190
      %s196 = scalar_lea.vmem [#allocation1], 16
      %197 = vst [vmem:[%s196] ss:$2 sm:$0xff] %v191
      %v198 = vld.sshfl [vmem:[#allocation1] sm:$0xff pattern:$0x75316420]
      %v199 = vld.sshfl [vmem:[#allocation1 + $0x8] sm:$0xff pattern:$0x75316420]
      %v200 = vld.sshfl [vmem:[#allocation1 + $0x10] sm:$0xff pattern:$0x75316420]
      %v201 = vld.sshfl [vmem:[#allocation1 + $0x18] sm:$0xff pattern:$0x75316420]
      %vm206 = vcmask 1043456
      %v207 = vsel %vm206, %v198, 0.0
      %v208 = vsel %vm206, %v199, 0.0
      %v209 = vadd.f32 %v207, %v208
      %v210 = vsel %vm206, %v200, 0.0
      %v211 = vadd.f32 %v209, %v210
      %v212 = vsel %vm206, %v201, 0.0
      %v213 = vadd.f32 %v211, %v212
      %214 = vadd.xlane.f32.xlu0 %v213
      %v215 = vpop.xlane.xlu0 %214
      %v216 = vadd.f32 %v192, %v215
      %vm217 = vcmask 3072
      %218 = vst.msk [vmem:[#allocation2] sm:$0xf] %vm217, %v216
      %v219 = vld [vmem:[#allocation3] sm:$0xf]
      %v220 = vmul.f32 %v190, %v190
      %v221 = vmul.f32 %v191, %v191
      %224 = vst [vmem:[#allocation1] ss:$2 sm:$0xff] %v220
      %s225 = scalar_lea.vmem [#allocation1], 16
      %226 = vst [vmem:[%s225] ss:$2 sm:$0xff] %v221
      %v227 = vld.sshfl [vmem:[#allocation1] sm:$0xff pattern:$0x75316420]
      %v228 = vld.sshfl [vmem:[#allocation1 + $0x8] sm:$0xff pattern:$0x75316420]
      %v229 = vld.sshfl [vmem:[#allocation1 + $0x10] sm:$0xff pattern:$0x75316420]
      %v230 = vld.sshfl [vmem:[#allocation1 + $0x18] sm:$0xff pattern:$0x75316420]
      %v235 = vsel %vm206, %v227, 0.0
      %v236 = vsel %vm206, %v228, 0.0
      %v237 = vadd.f32 %v235, %v236
      %v238 = vsel %vm206, %v229, 0.0
      %v239 = vadd.f32 %v237, %v238
      %v240 = vsel %vm206, %v230, 0.0
      %v241 = vadd.f32 %v239, %v240
      %242 = vadd.xlane.f32.xlu0 %v241
      %v243 = vpop.xlane.xlu0 %242
      %v244 = vadd.f32 %v219, %v243
      %245 = vst.msk [vmem:[#allocation3] sm:$0xf] %vm217, %v244
      %p246 = scmp.eq.s32.totalorder %s16, 3
      // Predicated region
      $region37: #{up_forward.9} parent=31 // pred_check
        %p247 = pneg %p246
      $region38: #{up_forward.9} parent=31 // pred_check_branch
        %249 = sbr.rel (%p247) target = $region40
      $region39: #{up_forward.9} parent=31 // pred_region
        %v250 = vld [vmem:[#allocation2] sm:$0xf]
        %v251 = vmul.f32 %v250, 0.00048828125
        %v252 = vld [vmem:[#allocation3] sm:$0xf]
        %v253 = vmul.f32 %v252, 0.00048828125
        %v254 = vmul.f32 %v251, %v251
        %v255 = vsub.f32 %v253, %v254
        %v256 = vmax.f32 %v255, 0.0
        %v257 = vld [vmem:[%s1] sm:$0xf]
        %v258 = vadd.f32 %v256, 1e-05
        %v259 = vrsqrt.pop %v258
        %v260 = vmul.f32 %v259, %v258
        %v261 = vmul.f32 %v260, %v259
        %v262 = vmul.f32 0.5, %v261
        %v263 = vsub.f32 1.5, %v262
        %v264 = vmul.f32 %v259, %v263
        %vm265 = vweird.f32 %v258
        %vm266 = vweird.f32 %v259
        %vm267 = vmor %vm265, %vm266
        %v268 = vsel %vm267, %v259, %v264
        %v269 = vmul.f32 %v257, %v268
        %270 = vst.msk [vmem:[%s3] sm:$0xf] %vm217, %v269
        %v271 = vld [vmem:[%s2] sm:$0xf]
        %v272 = vmul.f32 %v251, %v269
        %v273 = vsub.f32 %v271, %v272
        %274 = vst.msk [vmem:[%s4] sm:$0xf] %vm217, %v273
      $region40: #{up_forward.9} parent=31 // pred_fallthru
        _
      // Predicated region
      $region41: #{up_forward.9} parent=31 // pred_check
        %p275 = pneg %p97
      $region42: #{up_forward.9} parent=31 // pred_check_branch
        %277 = sbr.rel (%p275) target = $region44
      $region43: #{up_forward.9} parent=31 // pred_region
        _
      $region44: #{up_forward.9} parent=31 // pred_fallthru
        _
      // Predicated region
      $region45: #{up_forward.9} parent=31 // pred_check
        %p278 = pneg %p118
      $region46: #{up_forward.9} parent=31 // pred_check_branch
        %280 = sbr.rel (%p278) target = $region48
      $region47: #{up_forward.9} parent=31 // pred_region
        _
      $region48: #{up_forward.9} parent=31 // pred_fallthru
        _
      // Predicated region
      $region49: #{up_forward.9} parent=31 // pred_check
        %p281 = pneg %p97
      $region50: #{up_forward.9} parent=31 // pred_check_branch
        %283 = sbr.rel (%p281) target = $region52
      $region51: #{up_forward.9} parent=31 // pred_region
        _
      $region52: #{up_forward.9} parent=31 // pred_fallthru
        _
      // Predicated region
      $region53: #{up_forward.9} parent=31 // pred_check
        %p284 = pneg %p118
      $region54: #{up_forward.9} parent=31 // pred_check_branch
        %286 = sbr.rel (%p284) target = $region56
      $region55: #{up_forward.9} parent=31 // pred_region
        _
      $region56: #{up_forward.9} parent=31 // pred_fallthru
        _
    $region32: #{up_forward.9} parent=5 // pred_fallthru
      _
    %p287 = scmp.le.s32.totalorder 2, %s11
    // Predicated region
    $region57: #{up_forward.9} parent=5 // pred_check
      %p288 = pneg %p287
    $region58: #{up_forward.9} parent=5 // pred_check_branch
      %290 = sbr.rel (%p288) target = $region60
    $region59: #{up_forward.9} parent=5 // pred_region
      %s291 = ssub.s32 %s11, 2
    $region60: #{up_forward.9} parent=5 // pred_fallthru
      _
  $region6: #{up_forward.9} parent=0 // loop_footer
    %s15 = sadd.s32 1, %s11
  $region7: #{up_forward.9} parent=0 // loop_footer_branch
    %10 = sbr.rel target = $region3
  $region8: #{up_forward.9} parent=0 // loop_exit
    _

// kernel: up_forward.10
$region0: #{up_forward.10}
  #allocation0 [shape = 'u32[]', space=smem, size = 0x4, offset = 0x4, fixed_abs, tag = 'smem constant byte address 0x4 - core index']
  #allocation1 [shape = 'u32[72,128]{1,0:T(1,128)}', space=vmem, size = 0x9000, scoped, tag = 'internal scratch']
  %s0 = inlined_call_operand.vmem [shape: f32[4,2048], index: 0, kind: input, shape index: {}]
  %s1 = inlined_call_operand.vmem [shape: f32[4,1], index: 1, kind: input, shape index: {}]
  %s2 = inlined_call_operand.vmem [shape: f32[4,1], index: 2, kind: input, shape index: {}]
  %s3 = inlined_call_operand.vmem [shape: bf16[4,2048], index: 3, kind: output, shape index: {}]
  %s4 = sld [smem:[#allocation0]]
  $region45: #{up_forward.10} parent=0
    _
  %s6 = ssub.s32 1, %s4
  %s7 = scalar_select 0, %s6, %s4
  loop: start=0, step=1, limit=6
  $region2: #{up_forward.10} parent=0 // loop_pre_header
    _
  $region3: #{up_forward.10} parent=0 // loop_header
    %s9 = sphi 0, %s13
    %p10 = scmp.ge.s32.totalorder %s9, 6
    %s19 = sphi 0, %s21
    %s22 = sphi 0, %s19
    %s23 = sphi 0, %s22
    %s39 = sphi 0, %s23
    %s43 = sphi 0, %s43
    %s45 = sphi 0, %s43
    %s46 = sphi 0, %s45
    %s60 = sphi 0, %s46
    %s64 = sphi 0, %s64
    %s66 = sphi 0, %s64
    %s67 = sphi 0, %s66
    %s81 = sphi 0, %s67
    %s87 = sphi 0, %s89
    %s90 = sphi 0, %s87
    %s91 = sphi 0, %s90
    %s107 = sphi 0, %s91
  $region4: #{up_forward.10} parent=0 // loop_header_branch
    %12 = sbr.rel (%p10) target = $region8
  $region5: #{up_forward.10} parent=0 // loop_body
    %s14 = ssub.s32 %s9, 1
    %s15 = ssub.s32 %s9, 2
    %s16 = sadd.s32 %s9, 1
    %s17 = ssub.s32 %s9, %s16
    %p18 = scmp.eq.s32.totalorder %s17, 0
    %s20 = sadd.s32 %s19, 1
    %s21 = scalar_select %p18, %s19, %s20
    %p24 = pneg %p18
    %p25 = scmp.eq.s32.totalorder %s9, 3
    %p26 = por %p24, %p25
    %p27 = scmp.ne.s32.totalorder %s19, %s22
    %p28 = scmp.eq.s32.totalorder %s9, 0
    %p29 = por %p27, %p28
    %p30 = scmp.ne.s32.totalorder %s19, %s22
    %p31 = scmp.eq.s32.totalorder %s14, 3
    %p32 = por %p30, %p31
    %p33 = scmp.ne.s32.totalorder %s22, %s23
    %p34 = scmp.eq.s32.totalorder %s14, 0
    %p35 = por %p33, %p34
    %p36 = scmp.ne.s32.totalorder %s22, %s23
    %p37 = scmp.eq.s32.totalorder %s15, 3
    %p38 = por %p36, %p37
    %p40 = scmp.ne.s32.totalorder %s23, %s39
    %p41 = scmp.eq.s32.totalorder %s15, 0
    %p42 = por %p40, %p41
    %s44 = sadd.s32 %s43, 1
    %p47 = scmp.eq.s32.totalorder %s9, 3
    %p48 = scmp.ne.s32.totalorder %s43, %s45
    %p49 = scmp.eq.s32.totalorder %s9, 0
    %p50 = por %p48, %p49
    %p51 = scmp.ne.s32.totalorder %s43, %s45
    %p52 = scmp.eq.s32.totalorder %s14, 3
    %p53 = por %p51, %p52
    %p54 = scmp.ne.s32.totalorder %s45, %s46
    %p55 = scmp.eq.s32.totalorder %s14, 0
    %p56 = por %p54, %p55
    %p57 = scmp.ne.s32.totalorder %s45, %s46
    %p58 = scmp.eq.s32.totalorder %s15, 3
    %p59 = por %p57, %p58
    %p61 = scmp.ne.s32.totalorder %s46, %s60
    %p62 = scmp.eq.s32.totalorder %s15, 0
    %p63 = por %p61, %p62
    %s65 = sadd.s32 %s64, 1
    %p68 = scmp.eq.s32.totalorder %s9, 3
    %p69 = scmp.ne.s32.totalorder %s64, %s66
    %p70 = scmp.eq.s32.totalorder %s9, 0
    %p71 = por %p69, %p70
    %p72 = scmp.ne.s32.totalorder %s64, %s66
    %p73 = scmp.eq.s32.totalorder %s14, 3
    %p74 = por %p72, %p73
    %p75 = scmp.ne.s32.totalorder %s66, %s67
    %p76 = scmp.eq.s32.totalorder %s14, 0
    %p77 = por %p75, %p76
    %p78 = scmp.ne.s32.totalorder %s66, %s67
    %p79 = scmp.eq.s32.totalorder %s15, 3
    %p80 = por %p78, %p79
    %p82 = scmp.ne.s32.totalorder %s67, %s81
    %p83 = scmp.eq.s32.totalorder %s15, 0
    %p84 = por %p82, %p83
    %s85 = ssub.s32 %s9, %s16
    %p86 = scmp.eq.s32.totalorder %s85, 0
    %s88 = sadd.s32 %s87, 1
    %s89 = scalar_select %p86, %s87, %s88
    %p92 = pneg %p86
    %p93 = scmp.eq.s32.totalorder %s9, 3
    %p94 = por %p92, %p93
    %p95 = scmp.ne.s32.totalorder %s87, %s90
    %p96 = scmp.eq.s32.totalorder %s9, 0
    %p97 = por %p95, %p96
    %p98 = scmp.ne.s32.totalorder %s87, %s90
    %p99 = scmp.eq.s32.totalorder %s14, 3
    %p100 = por %p98, %p99
    %p101 = scmp.ne.s32.totalorder %s90, %s91
    %p102 = scmp.eq.s32.totalorder %s14, 0
    %p103 = por %p101, %p102
    %p104 = scmp.ne.s32.totalorder %s90, %s91
    %p105 = scmp.eq.s32.totalorder %s15, 3
    %p106 = por %p104, %p105
    %p108 = scmp.ne.s32.totalorder %s91, %s107
    %p109 = scmp.eq.s32.totalorder %s15, 0
    %p110 = por %p108, %p109
    %p111 = scmp.le.s32.totalorder 1, %s9
    %p112 = scmp.lt.s32.totalorder %s9, 5
    %p113 = pnand %p111, %p112
    %p114 = pneg %p113
    // Predicated region
    $region9: #{up_forward.10} parent=5 // pred_check
      _
    $region10: #{up_forward.10} parent=5 // pred_check_branch
      %116 = sbr.rel (%p113) target = $region12
    $region11: #{up_forward.10} parent=5 // pred_region
      %s117 = ssub.s32 %s9, 1
      // Predicated region
      $region13: #{up_forward.10} parent=11 // pred_check
        %p118 = pneg %p56
      $region14: #{up_forward.10} parent=11 // pred_check_branch
        %120 = sbr.rel (%p118) target = $region16
      $region15: #{up_forward.10} parent=11 // pred_region
        _
      $region16: #{up_forward.10} parent=11 // pred_fallthru
        _
      // Predicated region
      $region17: #{up_forward.10} parent=11 // pred_check
        %p121 = pneg %p77
      $region18: #{up_forward.10} parent=11 // pred_check_branch
        %123 = sbr.rel (%p121) target = $region20
      $region19: #{up_forward.10} parent=11 // pred_region
        _
      $region20: #{up_forward.10} parent=11 // pred_fallthru
        _
    $region12: #{up_forward.10} parent=5 // pred_fallthru
      _
    %p124 = scmp.lt.s32.totalorder %s9, 4
    // Predicated region
    $region21: #{up_forward.10} parent=5 // pred_check
      %p125 = pneg %p124
    $region22: #{up_forward.10} parent=5 // pred_check_branch
      %127 = sbr.rel (%p125) target = $region24
    $region23: #{up_forward.10} parent=5 // pred_region
      // Predicated region
      $region25: #{up_forward.10} parent=23 // pred_check
        %p128 = pneg %p29
      $region26: #{up_forward.10} parent=23 // pred_check_branch
        %130 = sbr.rel (%p128) target = $region28
      $region27: #{up_forward.10} parent=23 // pred_region
        %s131 = smul.u32 4, %s9
        %p132 = scmp.lt.s32.totalorder %s131, 15
        %s133 = scalar_select %p132, %s131, 15
        %s134 = smul.addr %s133, 4
        %s135 = scalar_lea.vmem %s0, %s134
        %s136 = smul.u32 4, %s9
      $region28: #{up_forward.10} parent=23 // pred_fallthru
        _
    $region24: #{up_forward.10} parent=5 // pred_fallthru
      _
    %p137 = scmp.le.s32.totalorder 1, %s9
    %p138 = scmp.lt.s32.totalorder %s9, 5
    %p139 = pnand %p137, %p138
    %p140 = pneg %p139
    // Predicated region
    $region29: #{up_forward.10} parent=5 // pred_check
      _
    $region30: #{up_forward.10} parent=5 // pred_check_branch
      %142 = sbr.rel (%p139) target = $region32
    $region31: #{up_forward.10} parent=5 // pred_region
      %s143 = ssub.s32 %s9, 1
      %s144 = smul.u32 4, %s14
      %p145 = scmp.lt.s32.totalorder %s144, 15
      %s146 = scalar_select %p145, %s144, 15
      %s147 = smul.addr %s146, 4
      %s148 = scalar_lea.vmem %s0, %s147
      %p149 = pneg %p35
      %p150 = pneg %p32
      %p151 = pneg %p56
      %p152 = pneg %p53
      %p153 = pneg %p77
      %p154 = pneg %p74
      %p155 = pneg %p103
      %p156 = pneg %p100
      %s157 = smul.u32 4, %s14
      %p158 = scmp.lt.s32.totalorder %s157, 15
      %s159 = scalar_select %p158, %s157, 15
      %s160 = smul.addr %s159, 2
      %s161 = scalar_lea.vmem %s3, %s160
      %s162 = smul.u32 4, %s14
      %p163 = scmp.lt.s32.totalorder %s162, 15
      %s164 = scalar_select %p163, %s162, 15
      %s165 = smul.addr %s164, 4
      %s166 = scalar_lea.vmem %s0, %s165
      %s167 = smul.u32 4, %s14
      %s168 = smul.u32 4, %s14
      %p169 = scmp.lt.s32.totalorder %s168, 15
      %s170 = scalar_select %p169, %s168, 15
      %s171 = smul.addr %s170, 2
      %s172 = scalar_lea.vmem %s3, %s171
      %s173 = smul.u32 4, %s14
      %v174 = vld [vmem:[%s166] sm:$0xff]
      %v175 = vld [vmem:[%s166 + $0x8] sm:$0xff]
      %v176 = vld [vmem:[%s1] sm:$0xf]
      %178 = vset.pattern.permute.xlu0 0
      %179 = vperm.xlu0 %178, %v176
      %v180 = vpop.permute.xlu0 %179
      %v182 = vunpack.c.l.s4 839922192
      %v183 = vunpack.c.0.s8 %v182
      %v184 = vperm.slane %v180, %v183
      %v186 = vmul.f32 %v174, %v184
      %v187 = vmul.f32 %v175, %v184
      %v188 = vld [vmem:[%s2] sm:$0xf]
      %190 = vset.pattern.permute.xlu0 0
      %191 = vperm.xlu0 %190, %v188
      %v192 = vpop.permute.xlu0 %191
      %v194 = vunpack.c.l.s4 839922192
      %v195 = vunpack.c.0.s8 %v194
      %v196 = vperm.slane %v192, %v195
      %v198 = vadd.f32 %v186, %v196
      %v199 = vadd.f32 %v187, %v196
      %v200 = vmax.f32 %v198, 0.0
      %v201 = vmax.f32 %v199, 0.0
      %204 = vst [vmem:[#allocation1] ss:$2 sm:$0xff] %v200
      %s205 = scalar_lea.vmem [#allocation1], 16
      %206 = vst [vmem:[%s205] ss:$2 sm:$0xff] %v201
      %v207 = vld.sshfl [vmem:[#allocation1] sm:$0xff pattern:$0x75316420]
      %v208 = vld.sshfl [vmem:[#allocation1 + $0x8] sm:$0xff pattern:$0x75316420]
      %v209 = vld.sshfl [vmem:[#allocation1 + $0x10] sm:$0xff pattern:$0x75316420]
      %v210 = vld.sshfl [vmem:[#allocation1 + $0x18] sm:$0xff pattern:$0x75316420]
      %v215 = vpack.c.bf16 %v208, %v207
      %v216 = vpack.c.bf16 %v210, %v209
      %v219 = vrot.slane %v215, 2
      %v220 = vrot.slane %v216, 4
      %v221 = vrot.slane %v216, 6
      %vm222 = vcmask 1041408
      %v225 = vsel %vm222, %v215, %v219
      %vm226 = vcmask 1045508
      %v229 = vsel %vm226, %v220, %v221
      %vm230 = vcmask 1043456
      %v231 = vsel %vm230, %v225, %v229
      %233 = vst [vmem:[%s172] sm:$0xff] %v231
      %s234 = smul.u32 4, %s14
      %p235 = scmp.lt.s32.totalorder %s234, 15
      %s236 = scalar_select %p235, %s234, 15
      %s237 = smul.addr %s236, 2
      %s238 = scalar_lea.vmem %s3, %s237
      // Predicated region
      $region33: #{up_forward.10} parent=31 // pred_check
        %p239 = pneg %p100
      $region34: #{up_forward.10} parent=31 // pred_check_branch
        %241 = sbr.rel (%p239) target = $region36
      $region35: #{up_forward.10} parent=31 // pred_region
        %s242 = smul.u32 4, %s14
      $region36: #{up_forward.10} parent=31 // pred_fallthru
        _
    $region32: #{up_forward.10} parent=5 // pred_fallthru
      _
    %p243 = scmp.le.s32.totalorder 2, %s9
    // Predicated region
    $region37: #{up_forward.10} parent=5 // pred_check
      %p244 = pneg %p243
    $region38: #{up_forward.10} parent=5 // pred_check_branch
      %246 = sbr.rel (%p244) target = $region40
    $region39: #{up_forward.10} parent=5 // pred_region
      %s247 = ssub.s32 %s9, 2
      // Predicated region
      $region41: #{up_forward.10} parent=39 // pred_check
        %p248 = pneg %p106
      $region42: #{up_forward.10} parent=39 // pred_check_branch
        %250 = sbr.rel (%p248) target = $region44
      $region43: #{up_forward.10} parent=39 // pred_region
        %s251 = smul.u32 4, %s15
        %p252 = scmp.lt.s32.totalorder %s251, 15
        %s253 = scalar_select %p252, %s251, 15
        %s254 = smul.addr %s253, 2
        %s255 = scalar_lea.vmem %s3, %s254
      $region44: #{up_forward.10} parent=39 // pred_fallthru
        _
    $region40: #{up_forward.10} parent=5 // pred_fallthru
      _
  $region6: #{up_forward.10} parent=0 // loop_footer
    %s13 = sadd.s32 1, %s9
  $region7: #{up_forward.10} parent=0 // loop_footer_branch
    %8 = sbr.rel target = $region3
  $region8: #{up_forward.10} parent=0 // loop_exit
    _

// kernel: up_forward.8
$region0: #{up_forward.8}
  #allocation0 [shape = 'u32[]', space=smem, size = 0x4, offset = 0x4, fixed_abs, tag = 'smem constant byte address 0x4 - core index']
  #allocation1 [shape = 'u32[72,128]{1,0:T(1,128)}', space=vmem, size = 0x9000, scoped, tag = 'internal scratch']
  #allocation2 [shape = 'f32[4,512]{1,0:T(4,128)}', space=vmem, size = 0x2000, scoped, tag = 'scratch operand']
  %s0 = inlined_call_operand.vmem [shape: bf16[4,72], index: 0, kind: input, shape index: {}]
  %s1 = inlined_call_operand.vmem [shape: bf16[72,2048], index: 1, kind: input, shape index: {}]
  %s2 = inlined_call_operand.vmem [shape: f32[4,2048], index: 2, kind: output, shape index: {}]
  %s3 = sld [smem:[#allocation0]]
  $region72: #{up_forward.8} parent=0
    _
  %s5 = ssub.s32 1, %s3
  %s6 = scalar_select 0, %s5, %s3
  $region1: #{up_forward.8} parent=0
    #allocation3 [shape = 'u8[147456]{0}', space=vmem, size = 0x24000, scoped, tag = 'input window, operand 1']
    loop: start=0, step=1, limit=6
    $region2: #{up_forward.8} parent=1 // loop_pre_header
      _
    $region3: #{up_forward.8} parent=1 // loop_header
      %s8 = sphi 0, %s12
      %p9 = scmp.ge.s32.totalorder %s8, 6
      %s15 = sphi 0, %s27
      %s16 = sphi 0, %s23
      %s17 = sphi 0, %s15
      %s18 = sphi 0, %s16
      %s19 = sphi 0, %s17
      %s20 = sphi 0, %s18
      %s30 = sphi 0, %s32
      %s33 = sphi 0, %s30
      %s34 = sphi 0, %s33
      %s50 = sphi 0, %s34
      %s58 = sphi 0, %s60
      %s61 = sphi 0, %s58
      %s62 = sphi 0, %s61
      %s78 = sphi 0, %s62
      %s84 = sphi 0, %s86
      %s87 = sphi 0, %s84
      %s88 = sphi 0, %s87
      %s104 = sphi 0, %s88
    $region4: #{up_forward.8} parent=1 // loop_header_branch
      %11 = sbr.rel (%p9) target = $region8
    $region5: #{up_forward.8} parent=1 // loop_body
      %s13 = ssub.s32 %s8, 1
      %s14 = ssub.s32 %s8, 2
      %s21 = sadd.s32 1, %s16
      %p22 = scmp.ge.s32.totalorder %s21, 1
      %s23 = scalar_select %p22, 0, %s21
      %s24 = sadd.s32 1, %s15
      %s25 = scalar_select %p22, %s24, %s15
      %p26 = scmp.ge.s32.totalorder %s25, 4
      %s27 = scalar_select %p26, 0, %s25
      %s28 = ssub.s32 %s16, %s23
      %p29 = scmp.eq.s32.totalorder %s28, 0
      %s31 = sadd.s32 %s30, 1
      %s32 = scalar_select %p29, %s30, %s31
      %p35 = pneg %p29
      %p36 = scmp.eq.s32.totalorder %s8, 3
      %p37 = por %p35, %p36
      %p38 = scmp.ne.s32.totalorder %s30, %s33
      %p39 = scmp.eq.s32.totalorder %s8, 0
      %p40 = por %p38, %p39
      %p41 = scmp.ne.s32.totalorder %s30, %s33
      %p42 = scmp.eq.s32.totalorder %s13, 3
      %p43 = por %p41, %p42
      %p44 = scmp.ne.s32.totalorder %s33, %s34
      %p45 = scmp.eq.s32.totalorder %s13, 0
      %p46 = por %p44, %p45
      %p47 = scmp.ne.s32.totalorder %s33, %s34
      %p48 = scmp.eq.s32.totalorder %s14, 3
      %p49 = por %p47, %p48
      %p51 = scmp.ne.s32.totalorder %s34, %s50
      %p52 = scmp.eq.s32.totalorder %s14, 0
      %p53 = por %p51, %p52
      %s54 = ssub.s32 %s16, %s23
      %s55 = ssub.s32 %s15, %s27
      %s56 = sor.u32 %s54, %s55
      %p57 = scmp.eq.s32.totalorder %s56, 0
      %s59 = sadd.s32 %s58, 1
      %s60 = scalar_select %p57, %s58, %s59
      %p63 = pneg %p57
      %p64 = scmp.eq.s32.totalorder %s8, 3
      %p65 = por %p63, %p64
      %p66 = scmp.ne.s32.totalorder %s58, %s61
      %p67 = scmp.eq.s32.totalorder %s8, 0
      %p68 = por %p66, %p67
      %p69 = scmp.ne.s32.totalorder %s58, %s61
      %p70 = scmp.eq.s32.totalorder %s13, 3
      %p71 = por %p69, %p70
      %p72 = scmp.ne.s32.totalorder %s61, %s62
      %p73 = scmp.eq.s32.totalorder %s13, 0
      %p74 = por %p72, %p73
      %p75 = scmp.ne.s32.totalorder %s61, %s62
      %p76 = scmp.eq.s32.totalorder %s14, 3
      %p77 = por %p75, %p76
      %p79 = scmp.ne.s32.totalorder %s62, %s78
      %p80 = scmp.eq.s32.totalorder %s14, 0
      %p81 = por %p79, %p80
      %s82 = ssub.s32 %s15, %s27
      %p83 = scmp.eq.s32.totalorder %s82, 0
      %s85 = sadd.s32 %s84, 1
      %s86 = scalar_select %p83, %s84, %s85
      %p89 = pneg %p83
      %p90 = scmp.eq.s32.totalorder %s8, 3
      %p91 = por %p89, %p90
      %p92 = scmp.ne.s32.totalorder %s84, %s87
      %p93 = scmp.eq.s32.totalorder %s8, 0
      %p94 = por %p92, %p93
      %p95 = scmp.ne.s32.totalorder %s84, %s87
      %p96 = scmp.eq.s32.totalorder %s13, 3
      %p97 = por %p95, %p96
      %p98 = scmp.ne.s32.totalorder %s87, %s88
      %p99 = scmp.eq.s32.totalorder %s13, 0
      %p100 = por %p98, %p99
      %p101 = scmp.ne.s32.totalorder %s87, %s88
      %p102 = scmp.eq.s32.totalorder %s14, 3
      %p103 = por %p101, %p102
      %p105 = scmp.ne.s32.totalorder %s88, %s104
      %p106 = scmp.eq.s32.totalorder %s14, 0
      %p107 = por %p105, %p106
      %p108 = scmp.le.s32.totalorder 1, %s8
      %p109 = scmp.lt.s32.totalorder %s8, 5
      %p110 = pnand %p108, %p109
      %p111 = pneg %p110
      // Predicated region
      $region9: #{up_forward.8} parent=5 // pred_check
        _
      $region10: #{up_forward.8} parent=5 // pred_check_branch
        %113 = sbr.rel (%p110) target = $region12
      $region11: #{up_forward.8} parent=5 // pred_region
        %s114 = ssub.s32 %s8, 1
        // Predicated region
        $region13: #{up_forward.8} parent=11 // pred_check
          %p115 = pneg %p46
        $region14: #{up_forward.8} parent=11 // pred_check_branch
          %117 = sbr.rel (%p115) target = $region16
        $region15: #{up_forward.8} parent=11 // pred_region
          %p118 = scmp.lt.s32.totalorder %s18, 0
          %s119 = scalar_select %p118, %s18, 0
          %s120 = smul.addr %s119, 2
          %s121 = scalar_lea.vmem %s0, %s120
        $region16: #{up_forward.8} parent=11 // pred_fallthru
          _
      $region12: #{up_forward.8} parent=5 // pred_fallthru
        _
      %p122 = scmp.lt.s32.totalorder %s8, 4
      // Predicated region
      $region17: #{up_forward.8} parent=5 // pred_check
        %p123 = pneg %p122
      $region18: #{up_forward.8} parent=5 // pred_check_branch
        %125 = sbr.rel (%p123) target = $region20
      $region19: #{up_forward.8} parent=5 // pred_region
        // Predicated region
        $region21: #{up_forward.8} parent=19 // pred_check
          %p126 = pneg %p68
        $region22: #{up_forward.8} parent=19 // pred_check_branch
          %128 = sbr.rel (%p126) target = $region24
        $region23: #{up_forward.8} parent=19 // pred_region
          %s129 = sand.u32 %s58, 1
          %s130 = sand.u32 %s58, 1
          %s131 = smul.addr %s130, 144
          %s132 = scalar_lea.vmem [#allocation3], %s131
          %s133 = smul.u32 9, %s16
          %s134 = smul.u32 4, %s15
          %s135 = smul.addr %s133, 16
          %s136 = sadd.s32 %s134, %s135
          %s137 = smul.addr %s136, 4
          %s138 = scalar_lea.vmem %s1, %s137
          // Predicated region
          $region25: #{up_forward.8} parent=23 // pred_check
            _
          $region26: #{up_forward.8} parent=23 // pred_check_branch
            %140 = sbr.rel (0) target = $region28
          $region27: #{up_forward.8} parent=23 // pred_region
            // Predicated region
            $region29: #{up_forward.8} parent=27 // pred_check
              _
            $region30: #{up_forward.8} parent=27 // pred_check_branch
              %142 = sbr.rel (0) target = $region32
            $region31: #{up_forward.8} parent=27 // pred_region
              loop: start=0, step=1, limit=1
              $region33: #{up_forward.8} parent=31 // loop_pre_header
                _
              $region34: #{up_forward.8} parent=31 // loop_header
                %s144 = sphi 0, %s148
                %p145 = scmp.ge.s32.totalorder %s144, 1
                %s149 = sphi %s138, %s138
                %s150 = sphi %s132, %s132
              $region35: #{up_forward.8} parent=31 // loop_header_branch
                %147 = sbr.rel (%p145) target = $region39
              $region36: #{up_forward.8} parent=31 // loop_body
                %v151 = vld [vmem:[%s149] sm:$0xff]
                %152 = vst [vmem:[%s150] sm:$0xff] %v151
                %v153 = vld [vmem:[%s149 + $0x8] sm:$0xff]
                %154 = vst [vmem:[%s150 + $0x8] sm:$0xff] %v153
                %v155 = vld [vmem:[%s149 + $0x40] sm:$0xff]
                %156 = vst [vmem:[%s150 + $0x10] sm:$0xff] %v155
                %v157 = vld [vmem:[%s149 + $0x48] sm:$0xff]
                %158 = vst [vmem:[%s150 + $0x18] sm:$0xff] %v157
                %v159 = vld [vmem:[%s149 + $0x80] sm:$0xff]
                %160 = vst [vmem:[%s150 + $0x20] sm:$0xff] %v159
                %v161 = vld [vmem:[%s149 + $0x88] sm:$0xff]
                %162 = vst [vmem:[%s150 + $0x28] sm:$0xff] %v161
                %v163 = vld [vmem:[%s149 + $0xc0] sm:$0xff]
                %164 = vst [vmem:[%s150 + $0x30] sm:$0xff] %v163
                %v165 = vld [vmem:[%s149 + $0xc8] sm:$0xff]
                %166 = vst [vmem:[%s150 + $0x38] sm:$0xff] %v165
                %v167 = vld [vmem:[%s149 + $0x100] sm:$0xff]
                %168 = vst [vmem:[%s150 + $0x40] sm:$0xff] %v167
                %v169 = vld [vmem:[%s149 + $0x108] sm:$0xff]
                %170 = vst [vmem:[%s150 + $0x48] sm:$0xff] %v169
                %v171 = vld [vmem:[%s149 + $0x140] sm:$0xff]
                %172 = vst [vmem:[%s150 + $0x50] sm:$0xff] %v171
                %v173 = vld [vmem:[%s149 + $0x148] sm:$0xff]
                %174 = vst [vmem:[%s150 + $0x58] sm:$0xff] %v173
                %v175 = vld [vmem:[%s149 + $0x180] sm:$0xff]
                %176 = vst [vmem:[%s150 + $0x60] sm:$0xff] %v175
                %v177 = vld [vmem:[%s149 + $0x188] sm:$0xff]
                %178 = vst [vmem:[%s150 + $0x68] sm:$0xff] %v177
                %v179 = vld [vmem:[%s149 + $0x1c0] sm:$0xff]
                %180 = vst [vmem:[%s150 + $0x70] sm:$0xff] %v179
                %v181 = vld [vmem:[%s149 + $0x1c8] sm:$0xff]
                %182 = vst [vmem:[%s150 + $0x78] sm:$0xff] %v181
                %v183 = vld [vmem:[%s149 + $0x200] sm:$0xff]
                %184 = vst [vmem:[%s150 + $0x80] sm:$0xff] %v183
                %v185 = vld [vmem:[%s149 + $0x208] sm:$0xff]
                %186 = vst [vmem:[%s150 + $0x88] sm:$0xff] %v185
              $region37: #{up_forward.8} parent=31 // loop_footer
                %s148 = sadd.s32 1, %s144
              $region38: #{up_forward.8} parent=31 // loop_footer_branch
                %143 = sbr.rel target = $region34
              $region39: #{up_forward.8} parent=31 // loop_exit
                _
            $region32: #{up_forward.8} parent=27 // pred_fallthru
              _
            // Predicated region
            $region40: #{up_forward.8} parent=27 // pred_check
              _
            $region41: #{up_forward.8} parent=27 // pred_check_branch
              %188 = sbr.rel target = $region43
            $region42: #{up_forward.8} parent=27 // pred_region
              _
            $region43: #{up_forward.8} parent=27 // pred_fallthru
              _
          $region28: #{up_forward.8} parent=23 // pred_fallthru
            _
          %189 = vnop
        $region24: #{up_forward.8} parent=19 // pred_fallthru
          _
      $region20: #{up_forward.8} parent=5 // pred_fallthru
        _
      %p190 = scmp.le.s32.totalorder 1, %s8
      %p191 = scmp.lt.s32.totalorder %s8, 5
      %p192 = pnand %p190, %p191
      %p193 = pneg %p192
      // Predicated region
      $region44: #{up_forward.8} parent=5 // pred_check
        _
      $region45: #{up_forward.8} parent=5 // pred_check_branch
        %195 = sbr.rel (%p192) target = $region47
      $region46: #{up_forward.8} parent=5 // pred_region
        %s196 = ssub.s32 %s8, 1
        %s197 = sand.u32 %s61, 1
        %s198 = sand.u32 %s61, 1
        %s199 = smul.addr %s198, 144
        %s200 = scalar_lea.vmem [#allocation3], %s199
        // Predicated region
        $region48: #{up_forward.8} parent=46 // pred_check
          %p201 = pneg %p74
        $region49: #{up_forward.8} parent=46 // pred_check_branch
          %203 = sbr.rel (%p201) target = $region51
        $region50: #{up_forward.8} parent=46 // pred_region
          _
        $region51: #{up_forward.8} parent=46 // pred_fallthru
          _
        %p204 = scmp.lt.s32.totalorder %s18, 0
        %s205 = scalar_select %p204, %s18, 0
        %s206 = smul.addr %s205, 2
        %s207 = scalar_lea.vmem %s0, %s206
        %p208 = pneg %p46
        %p209 = pneg %p43
        %s210 = sand.u32 %s61, 1
        %s211 = sand.u32 %s61, 1
        %s212 = smul.addr %s211, 144
        %s213 = scalar_lea.vmem [#allocation3], %s212
        %p214 = pneg %p74
        %p215 = pneg %p71
        %p216 = pneg %p100
        %p217 = pneg %p97
        %s218 = smul.u32 4, %s17
        %p219 = scmp.lt.s32.totalorder %s218, 15
        %s220 = scalar_select %p219, %s218, 15
        %s221 = smul.addr %s220, 4
        %s222 = scalar_lea.vmem %s2, %s221
        %p223 = scmp.lt.s32.totalorder %s18, 0
        %s224 = scalar_select %p223, %s18, 0
        %s225 = smul.addr %s224, 2
        %s226 = scalar_lea.vmem %s0, %s225
        %s227 = smul.u32 9, %s18
        %s228 = smul.u32 4, %s17
        %s229 = smul.u32 4, %s17
        %p230 = scmp.lt.s32.totalorder %s229, 15
        %s231 = scalar_select %p230, %s229, 15
        %s232 = smul.addr %s231, 4
        %s233 = scalar_lea.vmem %s2, %s232
        %s234 = smul.u32 4, %s17
        %p236 = scmp.eq.s32.totalorder %s18, 0
        // Predicated region
        $region52: #{up_forward.8} parent=46 // pred_check
          %p237 = pneg %p236
        $region53: #{up_forward.8} parent=46 // pred_check_branch
          %239 = sbr.rel (%p237) target = $region55
        $region54: #{up_forward.8} parent=46 // pred_region
          %240 = vst [vmem:[#allocation2] sm:$0xff] 0.0
          %241 = vst [vmem:[#allocation2 + $0x8] sm:$0xff] 0.0
        $region55: #{up_forward.8} parent=46 // pred_fallthru
          _
        %v242 = vld [vmem:[#allocation2] sm:$0xff]
        %v243 = vld [vmem:[#allocation2 + $0x8] sm:$0xff]
        %v244 = vld [vmem:[%s226] sm:$0x3]
        %v245 = vld [vmem:[%s200] sm:$0xff]
        %v246 = vld [vmem:[%s200 + $0x8] sm:$0xff]
        %v247 = vld [vmem:[%s200 + $0x10] sm:$0xff]
        %v248 = vld [vmem:[%s200 + $0x18] sm:$0xff]
        %v249 = vld [vmem:[%s200 + $0x20] sm:$0xff]
        %v250 = vld [vmem:[%s200 + $0x28] sm:$0xff]
        %v251 = vld [vmem:[%s200 + $0x30] sm:$0xff]
        %v252 = vld [vmem:[%s200 + $0x38] sm:$0xff]
        %v253 = vld [vmem:[%s200 + $0x40] sm:$0xff]
        %v254 = vld [vmem:[%s200 + $0x48] sm:$0xff]
        %v255 = vld [vmem:[%s200 + $0x50] sm:$0xff]
        %v256 = vld [vmem:[%s200 + $0x58] sm:$0xff]
        %v257 = vld [vmem:[%s200 + $0x60] sm:$0xff]
        %v258 = vld [vmem:[%s200 + $0x68] sm:$0xff]
        %v259 = vld [vmem:[%s200 + $0x70] sm:$0xff]
        %v260 = vld [vmem:[%s200 + $0x78] sm:$0xff]
        %v261 = vld [vmem:[%s200 + $0x80] sm:$0xff]
        %v262 = vld [vmem:[%s200 + $0x88] sm:$0xff]
        %v281 = vunpack.c.l.b16 %v245
        %v282 = vunpack.c.h.b16 %v245
        %v283 = vunpack.c.l.b16 %v246
        %v284 = vunpack.c.h.b16 %v246
        %v285 = vunpack.c.l.b16 %v247
        %v286 = vunpack.c.h.b16 %v247
        %v287 = vunpack.c.l.b16 %v248
        %v288 = vunpack.c.h.b16 %v248
        %v289 = vunpack.c.l.b16 %v249
        %v290 = vunpack.c.h.b16 %v249
        %v291 = vunpack.c.l.b16 %v250
        %v292 = vunpack.c.h.b16 %v250
        %v293 = vunpack.c.l.b16 %v251
        %v294 = vunpack.c.h.b16 %v251
        %v295 = vunpack.c.l.b16 %v252
        %v296 = vunpack.c.h.b16 %v252
        %v297 = vunpack.c.l.b16 %v253
        %v298 = vunpack.c.h.b16 %v253
        %v299 = vunpack.c.l.b16 %v254
        %v300 = vunpack.c.h.b16 %v254
        %v301 = vunpack.c.l.b16 %v255
        %v302 = vunpack.c.h.b16 %v255
        %v303 = vunpack.c.l.b16 %v256
        %v304 = vunpack.c.h.b16 %v256
        %v305 = vunpack.c.l.b16 %v257
        %v306 = vunpack.c.h.b16 %v257
        %v307 = vunpack.c.l.b16 %v258
        %v308 = vunpack.c.h.b16 %v258
        %v309 = vunpack.c.l.b16 %v259
        %v310 = vunpack.c.h.b16 %v259
        %v311 = vunpack.c.l.b16 %v260
        %v312 = vunpack.c.h.b16 %v260
        %v313 = vunpack.c.l.b16 %v261
        %v314 = vunpack.c.h.b16 %v261
        %v315 = vunpack.c.l.b16 %v262
        %v316 = vunpack.c.h.b16 %v262
        %v317 = vpack.c.b16 %v285, %v281
        %v318 = vpack.c.b16 %v286, %v282
        %v319 = vpack.c.b16 %v287, %v283
        %v320 = vpack.c.b16 %v288, %v284
        %v321 = vpack.c.b16 %v293, %v289
        %v322 = vpack.c.b16 %v294, %v290
        %v323 = vpack.c.b16 %v295, %v291
        %v324 = vpack.c.b16 %v296, %v292
        %v325 = vpack.c.b16 %v301, %v297
        %v326 = vpack.c.b16 %v302, %v298
        %v327 = vpack.c.b16 %v303, %v299
        %v328 = vpack.c.b16 %v304, %v300
        %v329 = vpack.c.b16 %v309, %v305
        %v330 = vpack.c.b16 %v310, %v306
        %v331 = vpack.c.b16 %v311, %v307
        %v332 = vpack.c.b16 %v312, %v308
        %v333 = vpack.c.b16 %v313, %v313
        %v334 = vpack.c.b16 %v314, %v314
        %v335 = vpack.c.b16 %v315, %v315
        %v336 = vpack.c.b16 %v316, %v316
        %vm353 = vcmask 588800
        %v355 = vsel %vm353, %v244, 0
        %vm357 = vcmask 1043456
        %v359 = vsel %vm357, %v333, 0
        %v362 = vsel %vm357, %v334, 0
        %v365 = vsel %vm357, %v335, 0
        %v368 = vsel %vm357, %v336, 0
        %370 = vmatpush.bf16.msra.mxu0 0
        %371 = vmatpush.bf16.msra.mxu0 0
        %372 = vmatpush.bf16.msra.mxu0 0
        %373 = vmatpush.bf16.msra.mxu0 %v359
        %374 = vmatpush.bf16.msra.mxu0 %v329
        %375 = vmatpush.bf16.msra.mxu0 %v325
        %376 = vmatpush.bf16.msra.mxu0 %v321
        %377 = vmatpush.bf16.msra.mxu0 %v317
        %378 = vmatmul.bf16.gmra.mxu0 %v355
        %v379 = vpop.f32.mrf.mxu0
        %v380 = vadd.f32 0.0, %v379
        %v381 = vpop.f32.mrf.mxu0
        %382 = vdwg.mxu0
        %383 = vmatpush.bf16.msra.mxu0 0
        %384 = vmatpush.bf16.msra.mxu0 0
        %385 = vmatpush.bf16.msra.mxu0 0
        %386 = vmatpush.bf16.msra.mxu0 %v362
        %387 = vmatpush.bf16.msra.mxu0 %v330
        %388 = vmatpush.bf16.msra.mxu0 %v326
        %389 = vmatpush.bf16.msra.mxu0 %v322
        %390 = vmatpush.bf16.msra.mxu0 %v318
        %391 = vmatmul.bf16.gmra.mxu0 %v355
        %v392 = vpop.f32.mrf.mxu0
        %v393 = vadd.f32 0.0, %v392
        %v394 = vpop.f32.mrf.mxu0
        %395 = vdwg.mxu0
        %396 = vmatpush.bf16.msra.mxu0 0
        %397 = vmatpush.bf16.msra.mxu0 0
        %398 = vmatpush.bf16.msra.mxu0 0
        %399 = vmatpush.bf16.msra.mxu0 %v365
        %400 = vmatpush.bf16.msra.mxu0 %v331
        %401 = vmatpush.bf16.msra.mxu0 %v327
        %402 = vmatpush.bf16.msra.mxu0 %v323
        %403 = vmatpush.bf16.msra.mxu0 %v319
        %404 = vmatmul.bf16.gmra.mxu0 %v355
        %v405 = vpop.f32.mrf.mxu0
        %v406 = vadd.f32 0.0, %v405
        %v407 = vpop.f32.mrf.mxu0
        %408 = vdwg.mxu0
        %409 = vmatpush.bf16.msra.mxu0 0
        %410 = vmatpush.bf16.msra.mxu0 0
        %411 = vmatpush.bf16.msra.mxu0 0
        %412 = vmatpush.bf16.msra.mxu0 %v368
        %413 = vmatpush.bf16.msra.mxu0 %v332
        %414 = vmatpush.bf16.msra.mxu0 %v328
        %415 = vmatpush.bf16.msra.mxu0 %v324
        %416 = vmatpush.bf16.msra.mxu0 %v320
        %417 = vmatmul.bf16.gmra.mxu0 %v355
        %v418 = vpop.f32.mrf.mxu0
        %v419 = vadd.f32 0.0, %v418
        %v420 = vpop.f32.mrf.mxu0
        %421 = vdwg.mxu0
        %v426 = vrot.slane %v393, 4
        %v427 = vrot.slane %v419, 4
        %v428 = vsel %vm357, %v380, %v426
        %v429 = vsel %vm357, %v406, %v427
        %v432 = vadd.f32 %v242, %v428
        %v433 = vadd.f32 %v243, %v429
        %434 = vst [vmem:[#allocation2] sm:$0xff] %v432
        %435 = vst [vmem:[#allocation2 + $0x8] sm:$0xff] %v433
        // Predicated region
        $region56: #{up_forward.8} parent=46 // pred_check
          %p436 = pneg %p236
        $region57: #{up_forward.8} parent=46 // pred_check_branch
          %438 = sbr.rel (%p436) target = $region59
        $region58: #{up_forward.8} parent=46 // pred_region
          %v439 = vld [vmem:[#allocation2] sm:$0xff]
          %v440 = vld [vmem:[#allocation2 + $0x8] sm:$0xff]
          %441 = vst [vmem:[%s233] sm:$0xff] %v439
          %442 = vst [vmem:[%s233 + $0x8] sm:$0xff] %v440
        $region59: #{up_forward.8} parent=46 // pred_fallthru
          _
        %s443 = smul.u32 4, %s17
        %p444 = scmp.lt.s32.totalorder %s443, 15
        %s445 = scalar_select %p444, %s443, 15
        %s446 = smul.addr %s445, 4
        %s447 = scalar_lea.vmem %s2, %s446
        // Predicated region
        $region60: #{up_forward.8} parent=46 // pred_check
          %p448 = pneg %p97
        $region61: #{up_forward.8} parent=46 // pred_check_branch
          %450 = sbr.rel (%p448) target = $region63
        $region62: #{up_forward.8} parent=46 // pred_region
          %s451 = smul.u32 4, %s17
        $region63: #{up_forward.8} parent=46 // pred_fallthru
          _
      $region47: #{up_forward.8} parent=5 // pred_fallthru
        _
      %p452 = scmp.le.s32.totalorder 2, %s8
      // Predicated region
      $region64: #{up_forward.8} parent=5 // pred_check
        %p453 = pneg %p452
      $region65: #{up_forward.8} parent=5 // pred_check_branch
        %455 = sbr.rel (%p453) target = $region67
      $region66: #{up_forward.8} parent=5 // pred_region
        %s456 = ssub.s32 %s8, 2
        // Predicated region
        $region68: #{up_forward.8} parent=66 // pred_check
          %p457 = pneg %p103
        $region69: #{up_forward.8} parent=66 // pred_check_branch
          %459 = sbr.rel (%p457) target = $region71
        $region70: #{up_forward.8} parent=66 // pred_region
          %s460 = smul.u32 4, %s19
          %p461 = scmp.lt.s32.totalorder %s460, 15
          %s462 = scalar_select %p461, %s460, 15
          %s463 = smul.addr %s462, 4
          %s464 = scalar_lea.vmem %s2, %s463
        $region71: #{up_forward.8} parent=66 // pred_fallthru
          _
      $region67: #{up_forward.8} parent=5 // pred_fallthru
        _
    $region6: #{up_forward.8} parent=1 // loop_footer
      %s12 = sadd.s32 1, %s8
    $region7: #{up_forward.8} parent=1 // loop_footer_branch
      %7 = sbr.rel target = $region3
    $region8: #{up_forward.8} parent=1 // loop_exit
      _

// kernel: up_forward.11
$region0: #{up_forward.11}
  #allocation0 [shape = 'u32[]', space=smem, size = 0x4, offset = 0x4, fixed_abs, tag = 'smem constant byte address 0x4 - core index']
  #allocation1 [shape = 'u32[72,128]{1,0:T(1,128)}', space=vmem, size = 0x9000, scoped, tag = 'internal scratch']
  #allocation2 [shape = 'f32[4,512]{1,0:T(4,128)}', space=vmem, size = 0x2000, scoped, tag = 'scratch operand']
  %s0 = inlined_call_operand.vmem [shape: bf16[4,36], index: 0, kind: input, shape index: {}]
  %s1 = inlined_call_operand.vmem [shape: bf16[36,2048], index: 1, kind: input, shape index: {}]
  %s2 = inlined_call_operand.vmem [shape: f32[4,2048], index: 2, kind: output, shape index: {}]
  %s3 = sld [smem:[#allocation0]]
  $region72: #{up_forward.11} parent=0
    _
  %s5 = ssub.s32 1, %s3
  %s6 = scalar_select 0, %s5, %s3
  $region1: #{up_forward.11} parent=0
    #allocation3 [shape = 'u8[81920]{0}', space=vmem, size = 0x14000, scoped, tag = 'input window, operand 1']
    loop: start=0, step=1, limit=6
    $region2: #{up_forward.11} parent=1 // loop_pre_header
      _
    $region3: #{up_forward.11} parent=1 // loop_header
      %s8 = sphi 0, %s12
      %p9 = scmp.ge.s32.totalorder %s8, 6
      %s15 = sphi 0, %s27
      %s16 = sphi 0, %s23
      %s17 = sphi 0, %s15
      %s18 = sphi 0, %s16
      %s19 = sphi 0, %s17
      %s20 = sphi 0, %s18
      %s30 = sphi 0, %s32
      %s33 = sphi 0, %s30
      %s34 = sphi 0, %s33
      %s50 = sphi 0, %s34
      %s58 = sphi 0, %s60
      %s61 = sphi 0, %s58
      %s62 = sphi 0, %s61
      %s78 = sphi 0, %s62
      %s84 = sphi 0, %s86
      %s87 = sphi 0, %s84
      %s88 = sphi 0, %s87
      %s104 = sphi 0, %s88
    $region4: #{up_forward.11} parent=1 // loop_header_branch
      %11 = sbr.rel (%p9) target = $region8
    $region5: #{up_forward.11} parent=1 // loop_body
      %s13 = ssub.s32 %s8, 1
      %s14 = ssub.s32 %s8, 2
      %s21 = sadd.s32 1, %s16
      %p22 = scmp.ge.s32.totalorder %s21, 1
      %s23 = scalar_select %p22, 0, %s21
      %s24 = sadd.s32 1, %s15
      %s25 = scalar_select %p22, %s24, %s15
      %p26 = scmp.ge.s32.totalorder %s25, 4
      %s27 = scalar_select %p26, 0, %s25
      %s28 = ssub.s32 %s16, %s23
      %p29 = scmp.eq.s32.totalorder %s28, 0
      %s31 = sadd.s32 %s30, 1
      %s32 = scalar_select %p29, %s30, %s31
      %p35 = pneg %p29
      %p36 = scmp.eq.s32.totalorder %s8, 3
      %p37 = por %p35, %p36
      %p38 = scmp.ne.s32.totalorder %s30, %s33
      %p39 = scmp.eq.s32.totalorder %s8, 0
      %p40 = por %p38, %p39
      %p41 = scmp.ne.s32.totalorder %s30, %s33
      %p42 = scmp.eq.s32.totalorder %s13, 3
      %p43 = por %p41, %p42
      %p44 = scmp.ne.s32.totalorder %s33, %s34
      %p45 = scmp.eq.s32.totalorder %s13, 0
      %p46 = por %p44, %p45
      %p47 = scmp.ne.s32.totalorder %s33, %s34
      %p48 = scmp.eq.s32.totalorder %s14, 3
      %p49 = por %p47, %p48
      %p51 = scmp.ne.s32.totalorder %s34, %s50
      %p52 = scmp.eq.s32.totalorder %s14, 0
      %p53 = por %p51, %p52
      %s54 = ssub.s32 %s16, %s23
      %s55 = ssub.s32 %s15, %s27
      %s56 = sor.u32 %s54, %s55
      %p57 = scmp.eq.s32.totalorder %s56, 0
      %s59 = sadd.s32 %s58, 1
      %s60 = scalar_select %p57, %s58, %s59
      %p63 = pneg %p57
      %p64 = scmp.eq.s32.totalorder %s8, 3
      %p65 = por %p63, %p64
      %p66 = scmp.ne.s32.totalorder %s58, %s61
      %p67 = scmp.eq.s32.totalorder %s8, 0
      %p68 = por %p66, %p67
      %p69 = scmp.ne.s32.totalorder %s58, %s61
      %p70 = scmp.eq.s32.totalorder %s13, 3
      %p71 = por %p69, %p70
      %p72 = scmp.ne.s32.totalorder %s61, %s62
      %p73 = scmp.eq.s32.totalorder %s13, 0
      %p74 = por %p72, %p73
      %p75 = scmp.ne.s32.totalorder %s61, %s62
      %p76 = scmp.eq.s32.totalorder %s14, 3
      %p77 = por %p75, %p76
      %p79 = scmp.ne.s32.totalorder %s62, %s78
      %p80 = scmp.eq.s32.totalorder %s14, 0
      %p81 = por %p79, %p80
      %s82 = ssub.s32 %s15, %s27
      %p83 = scmp.eq.s32.totalorder %s82, 0
      %s85 = sadd.s32 %s84, 1
      %s86 = scalar_select %p83, %s84, %s85
      %p89 = pneg %p83
      %p90 = scmp.eq.s32.totalorder %s8, 3
      %p91 = por %p89, %p90
      %p92 = scmp.ne.s32.totalorder %s84, %s87
      %p93 = scmp.eq.s32.totalorder %s8, 0
      %p94 = por %p92, %p93
      %p95 = scmp.ne.s32.totalorder %s84, %s87
      %p96 = scmp.eq.s32.totalorder %s13, 3
      %p97 = por %p95, %p96
      %p98 = scmp.ne.s32.totalorder %s87, %s88
      %p99 = scmp.eq.s32.totalorder %s13, 0
      %p100 = por %p98, %p99
      %p101 = scmp.ne.s32.totalorder %s87, %s88
      %p102 = scmp.eq.s32.totalorder %s14, 3
      %p103 = por %p101, %p102
      %p105 = scmp.ne.s32.totalorder %s88, %s104
      %p106 = scmp.eq.s32.totalorder %s14, 0
      %p107 = por %p105, %p106
      %p108 = scmp.le.s32.totalorder 1, %s8
      %p109 = scmp.lt.s32.totalorder %s8, 5
      %p110 = pnand %p108, %p109
      %p111 = pneg %p110
      // Predicated region
      $region9: #{up_forward.11} parent=5 // pred_check
        _
      $region10: #{up_forward.11} parent=5 // pred_check_branch
        %113 = sbr.rel (%p110) target = $region12
      $region11: #{up_forward.11} parent=5 // pred_region
        %s114 = ssub.s32 %s8, 1
        // Predicated region
        $region13: #{up_forward.11} parent=11 // pred_check
          %p115 = pneg %p46
        $region14: #{up_forward.11} parent=11 // pred_check_branch
          %117 = sbr.rel (%p115) target = $region16
        $region15: #{up_forward.11} parent=11 // pred_region
          %p118 = scmp.lt.s32.totalorder %s18, 0
          %s119 = scalar_select %p118, %s18, 0
          %s120 = smul.addr %s119, 2
          %s121 = scalar_lea.vmem %s0, %s120
        $region16: #{up_forward.11} parent=11 // pred_fallthru
          _
      $region12: #{up_forward.11} parent=5 // pred_fallthru
        _
      %p122 = scmp.lt.s32.totalorder %s8, 4
      // Predicated region
      $region17: #{up_forward.11} parent=5 // pred_check
        %p123 = pneg %p122
      $region18: #{up_forward.11} parent=5 // pred_check_branch
        %125 = sbr.rel (%p123) target = $region20
      $region19: #{up_forward.11} parent=5 // pred_region
        // Predicated region
        $region21: #{up_forward.11} parent=19 // pred_check
          %p126 = pneg %p68
        $region22: #{up_forward.11} parent=19 // pred_check_branch
          %128 = sbr.rel (%p126) target = $region24
        $region23: #{up_forward.11} parent=19 // pred_region
          %s129 = sand.u32 %s58, 1
          %s130 = sand.u32 %s58, 1
          %s131 = smul.addr %s130, 80
          %s132 = scalar_lea.vmem [#allocation3], %s131
          %s133 = smul.u32 5, %s16
          %s134 = smul.u32 4, %s15
          %s135 = smul.addr %s133, 16
          %s136 = sadd.s32 %s134, %s135
          %s137 = smul.addr %s136, 4
          %s138 = scalar_lea.vmem %s1, %s137
          // Predicated region
          $region25: #{up_forward.11} parent=23 // pred_check
            _
          $region26: #{up_forward.11} parent=23 // pred_check_branch
            %140 = sbr.rel (0) target = $region28
          $region27: #{up_forward.11} parent=23 // pred_region
            // Predicated region
            $region29: #{up_forward.11} parent=27 // pred_check
              _
            $region30: #{up_forward.11} parent=27 // pred_check_branch
              %142 = sbr.rel (0) target = $region32
            $region31: #{up_forward.11} parent=27 // pred_region
              loop: start=0, step=1, limit=1
              $region33: #{up_forward.11} parent=31 // loop_pre_header
                _
              $region34: #{up_forward.11} parent=31 // loop_header
                %s144 = sphi 0, %s148
                %p145 = scmp.ge.s32.totalorder %s144, 1
                %s149 = sphi %s138, %s138
                %s150 = sphi %s132, %s132
              $region35: #{up_forward.11} parent=31 // loop_header_branch
                %147 = sbr.rel (%p145) target = $region39
              $region36: #{up_forward.11} parent=31 // loop_body
                %v151 = vld [vmem:[%s149] sm:$0xff]
                %152 = vst [vmem:[%s150] sm:$0xff] %v151
                %v153 = vld [vmem:[%s149 + $0x8] sm:$0xff]
                %154 = vst [vmem:[%s150 + $0x8] sm:$0xff] %v153
                %v155 = vld [vmem:[%s149 + $0x40] sm:$0xff]
                %156 = vst [vmem:[%s150 + $0x10] sm:$0xff] %v155
                %v157 = vld [vmem:[%s149 + $0x48] sm:$0xff]
                %158 = vst [vmem:[%s150 + $0x18] sm:$0xff] %v157
                %v159 = vld [vmem:[%s149 + $0x80] sm:$0xff]
                %160 = vst [vmem:[%s150 + $0x20] sm:$0xff] %v159
                %v161 = vld [vmem:[%s149 + $0x88] sm:$0xff]
                %162 = vst [vmem:[%s150 + $0x28] sm:$0xff] %v161
                %v163 = vld [vmem:[%s149 + $0xc0] sm:$0xff]
                %164 = vst [vmem:[%s150 + $0x30] sm:$0xff] %v163
                %v165 = vld [vmem:[%s149 + $0xc8] sm:$0xff]
                %166 = vst [vmem:[%s150 + $0x38] sm:$0xff] %v165
                %v167 = vld [vmem:[%s149 + $0x100] sm:$0xff]
                %168 = vst [vmem:[%s150 + $0x40] sm:$0xff] %v167
                %v169 = vld [vmem:[%s149 + $0x108] sm:$0xff]
                %170 = vst [vmem:[%s150 + $0x48] sm:$0xff] %v169
              $region37: #{up_forward.11} parent=31 // loop_footer
                %s148 = sadd.s32 1, %s144
              $region38: #{up_forward.11} parent=31 // loop_footer_branch
                %143 = sbr.rel target = $region34
              $region39: #{up_forward.11} parent=31 // loop_exit
                _
            $region32: #{up_forward.11} parent=27 // pred_fallthru
              _
            // Predicated region
            $region40: #{up_forward.11} parent=27 // pred_check
              _
            $region41: #{up_forward.11} parent=27 // pred_check_branch
              %172 = sbr.rel target = $region43
            $region42: #{up_forward.11} parent=27 // pred_region
              _
            $region43: #{up_forward.11} parent=27 // pred_fallthru
              _
          $region28: #{up_forward.11} parent=23 // pred_fallthru
            _
          %173 = vnop
        $region24: #{up_forward.11} parent=19 // pred_fallthru
          _
      $region20: #{up_forward.11} parent=5 // pred_fallthru
        _
      %p174 = scmp.le.s32.totalorder 1, %s8
      %p175 = scmp.lt.s32.totalorder %s8, 5
      %p176 = pnand %p174, %p175
      %p177 = pneg %p176
      // Predicated region
      $region44: #{up_forward.11} parent=5 // pred_check
        _
      $region45: #{up_forward.11} parent=5 // pred_check_branch
        %179 = sbr.rel (%p176) target = $region47
      $region46: #{up_forward.11} parent=5 // pred_region
        %s180 = ssub.s32 %s8, 1
        %s181 = sand.u32 %s61, 1
        %s182 = sand.u32 %s61, 1
        %s183 = smul.addr %s182, 80
        %s184 = scalar_lea.vmem [#allocation3], %s183
        // Predicated region
        $region48: #{up_forward.11} parent=46 // pred_check
          %p185 = pneg %p74
        $region49: #{up_forward.11} parent=46 // pred_check_branch
          %187 = sbr.rel (%p185) target = $region51
        $region50: #{up_forward.11} parent=46 // pred_region
          _
        $region51: #{up_forward.11} parent=46 // pred_fallthru
          _
        %p188 = scmp.lt.s32.totalorder %s18, 0
        %s189 = scalar_select %p188, %s18, 0
        %s190 = smul.addr %s189, 2
        %s191 = scalar_lea.vmem %s0, %s190
        %p192 = pneg %p46
        %p193 = pneg %p43
        %s194 = sand.u32 %s61, 1
        %s195 = sand.u32 %s61, 1
        %s196 = smul.addr %s195, 80
        %s197 = scalar_lea.vmem [#allocation3], %s196
        %p198 = pneg %p74
        %p199 = pneg %p71
        %p200 = pneg %p100
        %p201 = pneg %p97
        %s202 = smul.u32 4, %s17
        %p203 = scmp.lt.s32.totalorder %s202, 15
        %s204 = scalar_select %p203, %s202, 15
        %s205 = smul.addr %s204, 4
        %s206 = scalar_lea.vmem %s2, %s205
        %p207 = scmp.lt.s32.totalorder %s18, 0
        %s208 = scalar_select %p207, %s18, 0
        %s209 = smul.addr %s208, 2
        %s210 = scalar_lea.vmem %s0, %s209
        %s211 = smul.u32 5, %s18
        %s212 = smul.u32 4, %s17
        %s213 = smul.u32 4, %s17
        %p214 = scmp.lt.s32.totalorder %s213, 15
        %s215 = scalar_select %p214, %s213, 15
        %s216 = smul.addr %s215, 4
        %s217 = scalar_lea.vmem %s2, %s216
        %s218 = smul.u32 4, %s17
        %p220 = scmp.eq.s32.totalorder %s18, 0
        // Predicated region
        $region52: #{up_forward.11} parent=46 // pred_check
          %p221 = pneg %p220
        $region53: #{up_forward.11} parent=46 // pred_check_branch
          %223 = sbr.rel (%p221) target = $region55
        $region54: #{up_forward.11} parent=46 // pred_region
          %224 = vst [vmem:[#allocation2] sm:$0xff] 0.0
          %225 = vst [vmem:[#allocation2 + $0x8] sm:$0xff] 0.0
        $region55: #{up_forward.11} parent=46 // pred_fallthru
          _
        %v226 = vld [vmem:[#allocation2] sm:$0xff]
        %v227 = vld [vmem:[#allocation2 + $0x8] sm:$0xff]
        %v228 = vld [vmem:[%s210] sm:$0x3]
        %v229 = vld [vmem:[%s184] sm:$0xff]
        %v230 = vld [vmem:[%s184 + $0x8] sm:$0xff]
        %v231 = vld [vmem:[%s184 + $0x10] sm:$0xff]
        %v232 = vld [vmem:[%s184 + $0x18] sm:$0xff]
        %v233 = vld [vmem:[%s184 + $0x20] sm:$0xff]
        %v234 = vld [vmem:[%s184 + $0x28] sm:$0xff]
        %v235 = vld [vmem:[%s184 + $0x30] sm:$0xff]
        %v236 = vld [vmem:[%s184 + $0x38] sm:$0xff]
        %v237 = vld [vmem:[%s184 + $0x40] sm:$0x33]
        %v238 = vld [vmem:[%s184 + $0x48] sm:$0x33]
        %v249 = vunpack.c.l.b16 %v229
        %v250 = vunpack.c.h.b16 %v229
        %v251 = vunpack.c.l.b16 %v230
        %v252 = vunpack.c.h.b16 %v230
        %v253 = vunpack.c.l.b16 %v231
        %v254 = vunpack.c.h.b16 %v231
        %v255 = vunpack.c.l.b16 %v232
        %v256 = vunpack.c.h.b16 %v232
        %v257 = vunpack.c.l.b16 %v233
        %v258 = vunpack.c.h.b16 %v233
        %v259 = vunpack.c.l.b16 %v234
        %v260 = vunpack.c.h.b16 %v234
        %v261 = vunpack.c.l.b16 %v235
        %v262 = vunpack.c.h.b16 %v235
        %v263 = vunpack.c.l.b16 %v236
        %v264 = vunpack.c.h.b16 %v236
        %v265 = vunpack.c.l.b16 %v237
        %v266 = vunpack.c.h.b16 %v237
        %v267 = vunpack.c.l.b16 %v238
        %v268 = vunpack.c.h.b16 %v238
        %v269 = vpack.c.b16 %v253, %v249
        %v270 = vpack.c.b16 %v254, %v250
        %v271 = vpack.c.b16 %v255, %v251
        %v272 = vpack.c.b16 %v256, %v252
        %v273 = vpack.c.b16 %v261, %v257
        %v274 = vpack.c.b16 %v262, %v258
        %v275 = vpack.c.b16 %v263, %v259
        %v276 = vpack.c.b16 %v264, %v260
        %v277 = vpack.c.b16 %v265, %v265
        %v278 = vpack.c.b16 %v266, %v266
        %v279 = vpack.c.b16 %v267, %v267
        %v280 = vpack.c.b16 %v268, %v268
        %vm289 = vcmask 293888
        %v291 = vsel %vm289, %v228, 0
        %vm293 = vcmask 1041408
        %v295 = vsel %vm293, %v277, 0
        %v298 = vsel %vm293, %v278, 0
        %v301 = vsel %vm293, %v279, 0
        %v304 = vsel %vm293, %v280, 0
        %306 = vmatpush.bf16.msra.mxu0 0
        %307 = vmatpush.bf16.msra.mxu0 0
        %308 = vmatpush.bf16.msra.mxu0 0
        %309 = vmatpush.bf16.msra.mxu0 0
        %310 = vmatpush.bf16.msra.mxu0 0
        %311 = vmatpush.bf16.msra.mxu0 %v295
        %312 = vmatpush.bf16.msra.mxu0 %v273
        %313 = vmatpush.bf16.msra.mxu0 %v269
        %314 = vmatmul.bf16.gmra.mxu0 %v291
        %v315 = vpop.f32.mrf.mxu0
        %v316 = vadd.f32 0.0, %v315
        %v317 = vpop.f32.mrf.mxu0
        %318 = vdwg.mxu0
        %319 = vmatpush.bf16.msra.mxu0 0
        %320 = vmatpush.bf16.msra.mxu0 0
        %321 = vmatpush.bf16.msra.mxu0 0
        %322 = vmatpush.bf16.msra.mxu0 0
        %323 = vmatpush.bf16.msra.mxu0 0
        %324 = vmatpush.bf16.msra.mxu0 %v298
        %325 = vmatpush.bf16.msra.mxu0 %v274
        %326 = vmatpush.bf16.msra.mxu0 %v270
        %327 = vmatmul.bf16.gmra.mxu0 %v291
        %v328 = vpop.f32.mrf.mxu0
        %v329 = vadd.f32 0.0, %v328
        %v330 = vpop.f32.mrf.mxu0
        %331 = vdwg.mxu0
        %332 = vmatpush.bf16.msra.mxu0 0
        %333 = vmatpush.bf16.msra.mxu0 0
        %334 = vmatpush.bf16.msra.mxu0 0
        %335 = vmatpush.bf16.msra.mxu0 0
        %336 = vmatpush.bf16.msra.mxu0 0
        %337 = vmatpush.bf16.msra.mxu0 %v301
        %338 = vmatpush.bf16.msra.mxu0 %v275
        %339 = vmatpush.bf16.msra.mxu0 %v271
        %340 = vmatmul.bf16.gmra.mxu0 %v291
        %v341 = vpop.f32.mrf.mxu0
        %v342 = vadd.f32 0.0, %v341
        %v343 = vpop.f32.mrf.mxu0
        %344 = vdwg.mxu0
        %345 = vmatpush.bf16.msra.mxu0 0
        %346 = vmatpush.bf16.msra.mxu0 0
        %347 = vmatpush.bf16.msra.mxu0 0
        %348 = vmatpush.bf16.msra.mxu0 0
        %349 = vmatpush.bf16.msra.mxu0 0
        %350 = vmatpush.bf16.msra.mxu0 %v304
        %351 = vmatpush.bf16.msra.mxu0 %v276
        %352 = vmatpush.bf16.msra.mxu0 %v272
        %353 = vmatmul.bf16.gmra.mxu0 %v291
        %v354 = vpop.f32.mrf.mxu0
        %v355 = vadd.f32 0.0, %v354
        %v356 = vpop.f32.mrf.mxu0
        %357 = vdwg.mxu0
        %v362 = vrot.slane %v329, 4
        %v363 = vrot.slane %v355, 4
        %vm364 = vcmask 1043456
        %v365 = vsel %vm364, %v316, %v362
        %v366 = vsel %vm364, %v342, %v363
        %v369 = vadd.f32 %v226, %v365
        %v370 = vadd.f32 %v227, %v366
        %371 = vst [vmem:[#allocation2] sm:$0xff] %v369
        %372 = vst [vmem:[#allocation2 + $0x8] sm:$0xff] %v370
        // Predicated region
        $region56: #{up_forward.11} parent=46 // pred_check
          %p373 = pneg %p220
        $region57: #{up_forward.11} parent=46 // pred_check_branch
          %375 = sbr.rel (%p373) target = $region59
        $region58: #{up_forward.11} parent=46 // pred_region
          %v376 = vld [vmem:[#allocation2] sm:$0xff]
          %v377 = vld [vmem:[#allocation2 + $0x8] sm:$0xff]
          %378 = vst [vmem:[%s217] sm:$0xff] %v376
          %379 = vst [vmem:[%s217 + $0x8] sm:$0xff] %v377
        $region59: #{up_forward.11} parent=46 // pred_fallthru
          _
        %s380 = smul.u32 4, %s17
        %p381 = scmp.lt.s32.totalorder %s380, 15
        %s382 = scalar_select %p381, %s380, 15
        %s383 = smul.addr %s382, 4
        %s384 = scalar_lea.vmem %s2, %s383
        // Predicated region
        $region60: #{up_forward.11} parent=46 // pred_check
          %p385 = pneg %p97
        $region61: #{up_forward.11} parent=46 // pred_check_branch
          %387 = sbr.rel (%p385) target = $region63
        $region62: #{up_forward.11} parent=46 // pred_region
          %s388 = smul.u32 4, %s17
        $region63: #{up_forward.11} parent=46 // pred_fallthru
          _
      $region47: #{up_forward.11} parent=5 // pred_fallthru
        _
      %p389 = scmp.le.s32.totalorder 2, %s8
      // Predicated region
      $region64: #{up_forward.11} parent=5 // pred_check
        %p390 = pneg %p389
      $region65: #{up_forward.11} parent=5 // pred_check_branch
        %392 = sbr.rel (%p390) target = $region67
      $region66: #{up_forward.11} parent=5 // pred_region
        %s393 = ssub.s32 %s8, 2
        // Predicated region
        $region68: #{up_forward.11} parent=66 // pred_check
          %p394 = pneg %p103
        $region69: #{up_forward.11} parent=66 // pred_check_branch
          %396 = sbr.rel (%p394) target = $region71
        $region70: #{up_forward.11} parent=66 // pred_region
          %s397 = smul.u32 4, %s19
          %p398 = scmp.lt.s32.totalorder %s397, 15
          %s399 = scalar_select %p398, %s397, 15
          %s400 = smul.addr %s399, 4
          %s401 = scalar_lea.vmem %s2, %s400
        $region71: #{up_forward.11} parent=66 // pred_fallthru
          _
      $region67: #{up_forward.11} parent=5 // pred_fallthru
        _
    $region6: #{up_forward.11} parent=1 // loop_footer
      %s12 = sadd.s32 1, %s8
    $region7: #{up_forward.11} parent=1 // loop_footer_branch
      %7 = sbr.rel target = $region3
    $region8: #{up_forward.11} parent=1 // loop_exit
      _

// kernel: up_forward.13
$region0: #{up_forward.13}
  #allocation0 [shape = 'u32[]', space=smem, size = 0x4, offset = 0x4, fixed_abs, tag = 'smem constant byte address 0x4 - core index']
  #allocation1 [shape = 'u32[72,128]{1,0:T(1,128)}', space=vmem, size = 0x9000, scoped, tag = 'internal scratch']
  %s0 = inlined_call_operand.vmem [shape: f32[4,2048], index: 0, kind: input, shape index: {}]
  %s1 = inlined_call_operand.vmem [shape: f32[4,1], index: 1, kind: input, shape index: {}]
  %s2 = inlined_call_operand.vmem [shape: f32[4,1], index: 2, kind: input, shape index: {}]
  %s3 = inlined_call_operand.vmem [shape: f32[4,2048], index: 3, kind: output, shape index: {}]
  %s4 = sld [smem:[#allocation0]]
  $region45: #{up_forward.13} parent=0
    _
  %s6 = ssub.s32 1, %s4
  %s7 = scalar_select 0, %s6, %s4
  loop: start=0, step=1, limit=6
  $region2: #{up_forward.13} parent=0 // loop_pre_header
    _
  $region3: #{up_forward.13} parent=0 // loop_header
    %s9 = sphi 0, %s13
    %p10 = scmp.ge.s32.totalorder %s9, 6
    %s19 = sphi 0, %s21
    %s22 = sphi 0, %s19
    %s23 = sphi 0, %s22
    %s39 = sphi 0, %s23
    %s43 = sphi 0, %s43
    %s45 = sphi 0, %s43
    %s46 = sphi 0, %s45
    %s60 = sphi 0, %s46
    %s64 = sphi 0, %s64
    %s66 = sphi 0, %s64
    %s67 = sphi 0, %s66
    %s81 = sphi 0, %s67
    %s87 = sphi 0, %s89
    %s90 = sphi 0, %s87
    %s91 = sphi 0, %s90
    %s107 = sphi 0, %s91
  $region4: #{up_forward.13} parent=0 // loop_header_branch
    %12 = sbr.rel (%p10) target = $region8
  $region5: #{up_forward.13} parent=0 // loop_body
    %s14 = ssub.s32 %s9, 1
    %s15 = ssub.s32 %s9, 2
    %s16 = sadd.s32 %s9, 1
    %s17 = ssub.s32 %s9, %s16
    %p18 = scmp.eq.s32.totalorder %s17, 0
    %s20 = sadd.s32 %s19, 1
    %s21 = scalar_select %p18, %s19, %s20
    %p24 = pneg %p18
    %p25 = scmp.eq.s32.totalorder %s9, 3
    %p26 = por %p24, %p25
    %p27 = scmp.ne.s32.totalorder %s19, %s22
    %p28 = scmp.eq.s32.totalorder %s9, 0
    %p29 = por %p27, %p28
    %p30 = scmp.ne.s32.totalorder %s19, %s22
    %p31 = scmp.eq.s32.totalorder %s14, 3
    %p32 = por %p30, %p31
    %p33 = scmp.ne.s32.totalorder %s22, %s23
    %p34 = scmp.eq.s32.totalorder %s14, 0
    %p35 = por %p33, %p34
    %p36 = scmp.ne.s32.totalorder %s22, %s23
    %p37 = scmp.eq.s32.totalorder %s15, 3
    %p38 = por %p36, %p37
    %p40 = scmp.ne.s32.totalorder %s23, %s39
    %p41 = scmp.eq.s32.totalorder %s15, 0
    %p42 = por %p40, %p41
    %s44 = sadd.s32 %s43, 1
    %p47 = scmp.eq.s32.totalorder %s9, 3
    %p48 = scmp.ne.s32.totalorder %s43, %s45
    %p49 = scmp.eq.s32.totalorder %s9, 0
    %p50 = por %p48, %p49
    %p51 = scmp.ne.s32.totalorder %s43, %s45
    %p52 = scmp.eq.s32.totalorder %s14, 3
    %p53 = por %p51, %p52
    %p54 = scmp.ne.s32.totalorder %s45, %s46
    %p55 = scmp.eq.s32.totalorder %s14, 0
    %p56 = por %p54, %p55
    %p57 = scmp.ne.s32.totalorder %s45, %s46
    %p58 = scmp.eq.s32.totalorder %s15, 3
    %p59 = por %p57, %p58
    %p61 = scmp.ne.s32.totalorder %s46, %s60
    %p62 = scmp.eq.s32.totalorder %s15, 0
    %p63 = por %p61, %p62
    %s65 = sadd.s32 %s64, 1
    %p68 = scmp.eq.s32.totalorder %s9, 3
    %p69 = scmp.ne.s32.totalorder %s64, %s66
    %p70 = scmp.eq.s32.totalorder %s9, 0
    %p71 = por %p69, %p70
    %p72 = scmp.ne.s32.totalorder %s64, %s66
    %p73 = scmp.eq.s32.totalorder %s14, 3
    %p74 = por %p72, %p73
    %p75 = scmp.ne.s32.totalorder %s66, %s67
    %p76 = scmp.eq.s32.totalorder %s14, 0
    %p77 = por %p75, %p76
    %p78 = scmp.ne.s32.totalorder %s66, %s67
    %p79 = scmp.eq.s32.totalorder %s15, 3
    %p80 = por %p78, %p79
    %p82 = scmp.ne.s32.totalorder %s67, %s81
    %p83 = scmp.eq.s32.totalorder %s15, 0
    %p84 = por %p82, %p83
    %s85 = ssub.s32 %s9, %s16
    %p86 = scmp.eq.s32.totalorder %s85, 0
    %s88 = sadd.s32 %s87, 1
    %s89 = scalar_select %p86, %s87, %s88
    %p92 = pneg %p86
    %p93 = scmp.eq.s32.totalorder %s9, 3
    %p94 = por %p92, %p93
    %p95 = scmp.ne.s32.totalorder %s87, %s90
    %p96 = scmp.eq.s32.totalorder %s9, 0
    %p97 = por %p95, %p96
    %p98 = scmp.ne.s32.totalorder %s87, %s90
    %p99 = scmp.eq.s32.totalorder %s14, 3
    %p100 = por %p98, %p99
    %p101 = scmp.ne.s32.totalorder %s90, %s91
    %p102 = scmp.eq.s32.totalorder %s14, 0
    %p103 = por %p101, %p102
    %p104 = scmp.ne.s32.totalorder %s90, %s91
    %p105 = scmp.eq.s32.totalorder %s15, 3
    %p106 = por %p104, %p105
    %p108 = scmp.ne.s32.totalorder %s91, %s107
    %p109 = scmp.eq.s32.totalorder %s15, 0
    %p110 = por %p108, %p109
    %p111 = scmp.le.s32.totalorder 1, %s9
    %p112 = scmp.lt.s32.totalorder %s9, 5
    %p113 = pnand %p111, %p112
    %p114 = pneg %p113
    // Predicated region
    $region9: #{up_forward.13} parent=5 // pred_check
      _
    $region10: #{up_forward.13} parent=5 // pred_check_branch
      %116 = sbr.rel (%p113) target = $region12
    $region11: #{up_forward.13} parent=5 // pred_region
      %s117 = ssub.s32 %s9, 1
      // Predicated region
      $region13: #{up_forward.13} parent=11 // pred_check
        %p118 = pneg %p56
      $region14: #{up_forward.13} parent=11 // pred_check_branch
        %120 = sbr.rel (%p118) target = $region16
      $region15: #{up_forward.13} parent=11 // pred_region
        _
      $region16: #{up_forward.13} parent=11 // pred_fallthru
        _
      // Predicated region
      $region17: #{up_forward.13} parent=11 // pred_check
        %p121 = pneg %p77
      $region18: #{up_forward.13} parent=11 // pred_check_branch
        %123 = sbr.rel (%p121) target = $region20
      $region19: #{up_forward.13} parent=11 // pred_region
        _
      $region20: #{up_forward.13} parent=11 // pred_fallthru
        _
    $region12: #{up_forward.13} parent=5 // pred_fallthru
      _
    %p124 = scmp.lt.s32.totalorder %s9, 4
    // Predicated region
    $region21: #{up_forward.13} parent=5 // pred_check
      %p125 = pneg %p124
    $region22: #{up_forward.13} parent=5 // pred_check_branch
      %127 = sbr.rel (%p125) target = $region24
    $region23: #{up_forward.13} parent=5 // pred_region
      // Predicated region
      $region25: #{up_forward.13} parent=23 // pred_check
        %p128 = pneg %p29
      $region26: #{up_forward.13} parent=23 // pred_check_branch
        %130 = sbr.rel (%p128) target = $region28
      $region27: #{up_forward.13} parent=23 // pred_region
        %s131 = smul.u32 4, %s9
        %p132 = scmp.lt.s32.totalorder %s131, 15
        %s133 = scalar_select %p132, %s131, 15
        %s134 = smul.addr %s133, 4
        %s135 = scalar_lea.vmem %s0, %s134
        %s136 = smul.u32 4, %s9
      $region28: #{up_forward.13} parent=23 // pred_fallthru
        _
    $region24: #{up_forward.13} parent=5 // pred_fallthru
      _
    %p137 = scmp.le.s32.totalorder 1, %s9
    %p138 = scmp.lt.s32.totalorder %s9, 5
    %p139 = pnand %p137, %p138
    %p140 = pneg %p139
    // Predicated region
    $region29: #{up_forward.13} parent=5 // pred_check
      _
    $region30: #{up_forward.13} parent=5 // pred_check_branch
      %142 = sbr.rel (%p139) target = $region32
    $region31: #{up_forward.13} parent=5 // pred_region
      %s143 = ssub.s32 %s9, 1
      %s144 = smul.u32 4, %s14
      %p145 = scmp.lt.s32.totalorder %s144, 15
      %s146 = scalar_select %p145, %s144, 15
      %s147 = smul.addr %s146, 4
      %s148 = scalar_lea.vmem %s0, %s147
      %p149 = pneg %p35
      %p150 = pneg %p32
      %p151 = pneg %p56
      %p152 = pneg %p53
      %p153 = pneg %p77
      %p154 = pneg %p74
      %p155 = pneg %p103
      %p156 = pneg %p100
      %s157 = smul.u32 4, %s14
      %p158 = scmp.lt.s32.totalorder %s157, 15
      %s159 = scalar_select %p158, %s157, 15
      %s160 = smul.addr %s159, 4
      %s161 = scalar_lea.vmem %s3, %s160
      %s162 = smul.u32 4, %s14
      %p163 = scmp.lt.s32.totalorder %s162, 15
      %s164 = scalar_select %p163, %s162, 15
      %s165 = smul.addr %s164, 4
      %s166 = scalar_lea.vmem %s0, %s165
      %s167 = smul.u32 4, %s14
      %s168 = smul.u32 4, %s14
      %p169 = scmp.lt.s32.totalorder %s168, 15
      %s170 = scalar_select %p169, %s168, 15
      %s171 = smul.addr %s170, 4
      %s172 = scalar_lea.vmem %s3, %s171
      %s173 = smul.u32 4, %s14
      %v174 = vld [vmem:[%s166] sm:$0xff]
      %v175 = vld [vmem:[%s166 + $0x8] sm:$0xff]
      %v176 = vld [vmem:[%s1] sm:$0xf]
      %178 = vset.pattern.permute.xlu0 0
      %179 = vperm.xlu0 %178, %v176
      %v180 = vpop.permute.xlu0 %179
      %v182 = vunpack.c.l.s4 839922192
      %v183 = vunpack.c.0.s8 %v182
      %v184 = vperm.slane %v180, %v183
      %v186 = vmul.f32 %v174, %v184
      %v187 = vmul.f32 %v175, %v184
      %v188 = vld [vmem:[%s2] sm:$0xf]
      %190 = vset.pattern.permute.xlu0 0
      %191 = vperm.xlu0 %190, %v188
      %v192 = vpop.permute.xlu0 %191
      %v194 = vunpack.c.l.s4 839922192
      %v195 = vunpack.c.0.s8 %v194
      %v196 = vperm.slane %v192, %v195
      %v198 = vadd.f32 %v186, %v196
      %v199 = vadd.f32 %v187, %v196
      %v200 = vmax.f32 %v198, 0.0
      %v201 = vmax.f32 %v199, 0.0
      %202 = vst [vmem:[%s172] sm:$0xff] %v200
      %203 = vst [vmem:[%s172 + $0x8] sm:$0xff] %v201
      %s204 = smul.u32 4, %s14
      %p205 = scmp.lt.s32.totalorder %s204, 15
      %s206 = scalar_select %p205, %s204, 15
      %s207 = smul.addr %s206, 4
      %s208 = scalar_lea.vmem %s3, %s207
      // Predicated region
      $region33: #{up_forward.13} parent=31 // pred_check
        %p209 = pneg %p100
      $region34: #{up_forward.13} parent=31 // pred_check_branch
        %211 = sbr.rel (%p209) target = $region36
      $region35: #{up_forward.13} parent=31 // pred_region
        %s212 = smul.u32 4, %s14
      $region36: #{up_forward.13} parent=31 // pred_fallthru
        _
    $region32: #{up_forward.13} parent=5 // pred_fallthru
      _
    %p213 = scmp.le.s32.totalorder 2, %s9
    // Predicated region
    $region37: #{up_forward.13} parent=5 // pred_check
      %p214 = pneg %p213
    $region38: #{up_forward.13} parent=5 // pred_check_branch
      %216 = sbr.rel (%p214) target = $region40
    $region39: #{up_forward.13} parent=5 // pred_region
      %s217 = ssub.s32 %s9, 2
      // Predicated region
      $region41: #{up_forward.13} parent=39 // pred_check
        %p218 = pneg %p106
      $region42: #{up_forward.13} parent=39 // pred_check_branch
        %220 = sbr.rel (%p218) target = $region44
      $region43: #{up_forward.13} parent=39 // pred_region
        %s221 = smul.u32 4, %s15
        %p222 = scmp.lt.s32.totalorder %s221, 15
        %s223 = scalar_select %p222, %s221, 15
        %s224 = smul.addr %s223, 4
        %s225 = scalar_lea.vmem %s3, %s224
      $region44: #{up_forward.13} parent=39 // pred_fallthru
        _
    $region40: #{up_forward.13} parent=5 // pred_fallthru
      _
  $region6: #{up_forward.13} parent=0 // loop_footer
    %s13 = sadd.s32 1, %s9
  $region7: #{up_forward.13} parent=0 // loop_footer_branch
    %8 = sbr.rel target = $region3
  $region8: #{up_forward.13} parent=0 // loop_exit
    _

</llo_original>
